<compile_context>
chip_gen: v6e
topology: v6e:2x2x1
jax: 0.10.0
libtpu: 0.0.40
codegen_flags: <defaults>
</compile_context>

<pallas_src>
import numpy as np
import jax
import jax.numpy as jnp
from jax.experimental import pallas as pl
from jax.experimental.pallas import tpu as pltpu

EPSILON = 1e-08

RBF_LOW = 0.0
RBF_HIGH = 2.5
RBF_COUNT = 4

# Six (shared) pair filters, in the lane-stacking order used everywhere below:
#   filter:        f00  f01  f02  f10  f11  f22
#   m components:    1    3    5    3    3    5      (NCOMP = 20 total)
# Component c of the fused filter tensor lives in lanes [c*od, (c+1)*od).
FILTER_NAMES = ('f00', 'f01', 'f02', 'f10', 'f11', 'f22')
FILTER_NCOMP = (1, 3, 5, 3, 3, 5)
NCOMP = sum(FILTER_NCOMP)                       # 20
C_F00, C_F01, C_F02, C_F10, C_F11, C_F22 = 0, 1, 4, 9, 12, 15


# --------------------------------------------------------------------------- helpers
def get_eijk():
    e = np.zeros((3, 3, 3), np.float32)
    e[0, 1, 2] = e[1, 2, 0] = e[2, 0, 1] = 1.0
    e[0, 2, 1] = e[2, 1, 0] = e[1, 0, 2] = -1.0
    return e


def y2(rij):
    x, y, z = rij[..., 0], rij[..., 1], rij[..., 2]
    r2 = jnp.maximum(jnp.sum(rij ** 2, axis=-1), EPSILON)
    return jnp.stack(
        [x * y / r2,
         y * z / r2,
         (-x ** 2 - y ** 2 + 2.0 * z ** 2) / (2.0 * np.sqrt(3.0) * r2),
         z * x / r2,
         (x ** 2 - y ** 2) / (2.0 * r2)],
        axis=-1)


# --------------------------------------------------------------------------- kernel 1
def _radial_kernel(rbf_ref, w1_ref, b1_ref, w2_ref, b2_ref, yrep_ref, out_ref):
    """relu MLP for all six RadialFunctions at once (block-packed weights), followed by
    the per-(filter, m) Y_lm * mask factor (pre-folded on the host into yrep)."""
    h = jnp.dot(rbf_ref[...], w1_ref[...],
                preferred_element_type=jnp.float32) + b1_ref[...]
    h = jnp.maximum(h, 0.0)
    radial = jnp.dot(h, w2_ref[...],
                     preferred_element_type=jnp.float32) + b2_ref[...]
    out_ref[...] = radial * yrep_ref[...]          # [tm, 20*od] lane-dense store


def _row_tile(M):
    # one grid step when the pair count is small; big row tiles otherwise
    # (per-grid-step overhead ~0.35us makes tiny tiles pure overhead).
    for t in (1024, 512, 256):
        if M % t == 0:
            return t
    return M


def fused_radial_filters(packed, rbf_flat, yrep):
    M, R = rbf_flat.shape
    H6 = packed['w1_all'].shape[1]
    C = packed['w2_exp'].shape[1]
    tm = _row_tile(M)
    return pl.pallas_call(
        _radial_kernel,
        out_shape=jax.ShapeDtypeStruct((M, C), jnp.float32),
        grid=(M // tm,),
        in_specs=[
            pl.BlockSpec((tm, R), lambda m: (m, 0)),
            pl.BlockSpec((R, H6), lambda m: (0, 0)),
            pl.BlockSpec((1, H6), lambda m: (0, 0)),
            pl.BlockSpec((H6, C), lambda m: (0, 0)),
            pl.BlockSpec((1, C), lambda m: (0, 0)),
            pl.BlockSpec((tm, C), lambda m: (m, 0)),
        ],
        out_specs=pl.BlockSpec((tm, C), lambda m: (m, 0)),
        compiler_params=pltpu.CompilerParams(dimension_semantics=("parallel",)),
    )(rbf_flat, packed['w1_all'], packed['b1_all'],
      packed['w2_exp'], packed['b2_exp'], yrep)


# --------------------------------------------------------------------------- kernel 2
def _network_kernel(f_ref, rep_ref, a1_ref, b1_ref, xr_ref, a2_ref,
                    oh_ref, ew_ref, eb_ref, out_ref):
    FR = f_ref[...]                                  # [N, N, NCOMP*od]  (a, b, c*od+f)

    def conv_all(xr):
        # T[a, c*od+f] = sum_b F_c[a, b, f] * X[b, f]  for every filter component c.
        # X arrives pre-replicated along the component axis: xr[b, c*od+f] = X[b, f].
        return jnp.sum(FR * xr[None, :, :], axis=1)                   # [N, NCOMP*od]

    # embedding: SelfInteractionLayerWithBiases on the one-hot atom types
    e = jnp.dot(oh_ref[...], ew_ref[...],
                preferred_element_type=jnp.float32) + eb_ref[...]     # [N, od]

    # ---- layer 1: conv -> CG combine -> self-interaction -> ELU(+bias), fully fused.
    # a1 / b1 fold the Clebsch-Gordan signs (eijk with the L=0 k-broadcast, delta_ij),
    # the SI weights and both bias terms for all nine m-slots [t0 | t1_0..2 | t2_0..4].
    te = conv_all(jnp.dot(e, rep_ref[...], preferred_element_type=jnp.float32))
    pre = jnp.dot(te, a1_ref[...], preferred_element_type=jnp.float32) + b1_ref[...]
    t_all = jnp.where(pre > 0.0, pre, jnp.exp(jnp.minimum(pre, 0.0)) - 1.0)  # ELU

    # ---- layer 2: conv of (t0, t1) -> eijk combine -> two-path mean -> SI, for the
    # L=1 head only (the reference's layer-2 L=0 / L=2 heads never reach the output).
    acc = jnp.zeros(out_ref.shape, jnp.float32)
    for m in range(4):           # m=0: t0 path through F01, m=1..3: t1[m-1] through F11
        xr = jnp.dot(t_all, xr_ref[m], preferred_element_type=jnp.float32)
        tm = conv_all(xr)
        acc = acc + jnp.dot(tm, a2_ref[m], preferred_element_type=jnp.float32)
    out_ref[...] = acc                                                # [N, 3*od]


def fused_tfn_network(packed, f3, one_hot):
    N = one_hot.shape[0]
    od = packed['embed_b'].shape[1]
    vmem = pl.BlockSpec(memory_space=pltpu.MemorySpace.VMEM)
    return pl.pallas_call(
        _network_kernel,
        out_shape=jax.ShapeDtypeStruct((N, 3 * od), jnp.float32),
        in_specs=[vmem] * 9,
        out_specs=vmem,
    )(f3, packed['rep'], packed['a1'], packed['b1'], packed['xrep'], packed['a2'],
      one_hot, packed['embed_wt'], packed['embed_b'])


# --------------------------------------------------------------------------- params
def init_params(key, num_atom_types, od, rbf_count):
    hidden = rbf_count   # RadialFunction: hidden_dim defaults to input_dim
    ks = list(jax.random.split(key, 10))

    def w(k, shape):
        return 0.3 * jax.random.normal(k, shape, jnp.float32)

    def radial(k):
        k1, k2 = jax.random.split(k)
        return {'w1': w(k1, (hidden, rbf_count)), 'b1': jnp.zeros((hidden,), jnp.float32),
                'w2': w(k2, (od, hidden)), 'b2': jnp.zeros((od,), jnp.float32)}

    return {
        'embed_w': w(ks[0], (od, num_atom_types)), 'embed_b': jnp.zeros((od,), jnp.float32),
        'f00': radial(ks[1]), 'f01': radial(ks[2]), 'f02': radial(ks[3]),
        'f10': radial(ks[4]), 'f11': radial(ks[5]), 'f22': radial(ks[6]),
        'si_l0_w': w(ks[7], (od, od)), 'si_l0_b': jnp.zeros((od,), jnp.float32),
        'si_l1_w': w(ks[8], (od, od)),
        'si_l2_w': w(ks[9], (od, od)),
        'nl_b0': jnp.zeros((1,), jnp.float32),
        'nl_b1': jnp.zeros((3,), jnp.float32),
        'nl_b2': jnp.zeros((5,), jnp.float32),
    }


def pack_params(params):
    """One-time repacking of the per-filter / per-L weights into the fused layouts."""
    od = params['si_l1_w'].shape[0]
    H = params['f00']['w1'].shape[0]
    C = NCOMP * od
    eijk = get_eijk()

    # ---- kernel 1: fused radial MLP (weights of the six RadialFunctions packed wide)
    w1_all = np.concatenate([np.asarray(params[n]['w1']).T for n in FILTER_NAMES], axis=1)
    b1_all = np.concatenate([np.asarray(params[n]['b1']) for n in FILTER_NAMES])[None, :]
    w2_exp = np.zeros((len(FILTER_NAMES) * H, C), np.float32)
    b2_exp = np.zeros((1, C), np.float32)
    c = 0
    for fi, name in enumerate(FILTER_NAMES):
        w2t = np.asarray(params[name]['w2']).T          # [H, od]
        b2 = np.asarray(params[name]['b2'])
        for _ in range(FILTER_NCOMP[fi]):
            w2_exp[fi * H:(fi + 1) * H, c * od:(c + 1) * od] = w2t
            b2_exp[0, c * od:(c + 1) * od] = b2
            c += 1

    # ---- kernel 2: network constants with CG / SI / biases folded in
    W0t = np.asarray(params['si_l0_w']).T               # (f, g) = W[g, f]
    W1t = np.asarray(params['si_l1_w']).T
    W2t = np.asarray(params['si_l2_w']).T
    si0_b = np.asarray(params['si_l0_b'])
    nl_b0 = np.asarray(params['nl_b0'])
    nl_b1 = np.asarray(params['nl_b1'])
    nl_b2 = np.asarray(params['nl_b2'])

    rep = np.tile(np.eye(od, dtype=np.float32), (1, NCOMP))          # [od, C]

    def blk(mat, comp_row, slot_col, val):
        mat[comp_row * od:(comp_row + 1) * od, slot_col * od:(slot_col + 1) * od] += val

    # layer 1: t_all = elu(Te @ A1 + B1); slots = [t0 | t1_0..2 | t2_0..4]
    A1 = np.zeros((C, 9 * od), np.float32)
    B1 = np.zeros((1, 9 * od), np.float32)
    blk(A1, C_F00, 0, W0t)                                           # L=0 head (SI with bias)
    B1[0, 0:od] = si0_b + nl_b0[0]
    for i in range(3):                                               # L=1 head (eijk, k bcast)
        for j in range(3):
            s = float(eijk[i, j, :].sum())
            if s != 0.0:
                blk(A1, C_F01 + j, 1 + i, s * W1t)
        B1[0, (1 + i) * od:(2 + i) * od] = nl_b1[i]
    for i in range(5):                                               # L=2 head (delta_ij)
        blk(A1, C_F02 + i, 4 + i, W2t)
        B1[0, (4 + i) * od:(5 + i) * od] = nl_b2[i]

    # layer 2 (L=1 head): replicate t0 / t1[k] across all NCOMP filter components ...
    XREP = np.zeros((4, 9 * od, C), np.float32)
    for m in range(4):
        for cc in range(NCOMP):
            XREP[m, m * od:(m + 1) * od, cc * od:(cc + 1) * od] = np.eye(od, dtype=np.float32)
    # ... then fold eijk, the two-path meanation (x0.5) and the L=1 SI weights.
    A2 = np.zeros((4, C, 3 * od), np.float32)
    for i in range(3):
        for j in range(3):
            s = float(eijk[i, j, :].sum())
            if s != 0.0:                                             # F01 against t0 path
                A2[0, (C_F01 + j) * od:(C_F01 + j + 1) * od,
                   i * od:(i + 1) * od] += 0.5 * s * W1t
            for k in range(3):                                       # F11 against t1[k] path
                v = float(eijk[i, j, k])
                if v != 0.0:
                    A2[1 + k, (C_F11 + j) * od:(C_F11 + j + 1) * od,
                       i * od:(i + 1) * od] += 0.5 * v * W1t

    out = dict(
        w1_all=w1_all, b1_all=b1_all, w2_exp=w2_exp, b2_exp=b2_exp,
        rep=rep, a1=A1, b1=B1, xrep=XREP, a2=A2,
        embed_wt=np.asarray(params['embed_w']).T,
        embed_b=np.asarray(params['embed_b'])[None, :],
    )
    return {k: jnp.asarray(v, dtype=jnp.float32) for k, v in out.items()}


# --------------------------------------------------------------------------- forward
def tfn_forward(packed, coords, one_hot):
    N = coords.shape[0]
    od = packed['embed_b'].shape[1]
    C = NCOMP * od
    M = N * N

    # --- geometry (glue): rij, rbf, unit vectors, Y_1 / Y_2, diagonal mask ---
    rij = coords[:, None, :] - coords[None, :, :]                 # difference_matrix
    dij = jnp.sqrt(jnp.sum(rij ** 2, axis=-1))                    # distance_matrix
    uv = rij / (dij[..., None] + EPSILON)                         # "unit_vectors" in TFN.forward
    spacing = (RBF_HIGH - RBF_LOW) / RBF_COUNT
    gamma = 1.0 / spacing
    centers = jnp.linspace(RBF_LOW, RBF_HIGH, RBF_COUNT)
    rbf = jnp.exp(-gamma * (dij[..., None] - centers) ** 2)       # [N, N, R]
    rbf_flat = rbf.reshape(M, RBF_COUNT)

    uvn = jnp.sqrt(jnp.sum(uv ** 2, axis=-1))                     # norm of the passed "rij"
    mask = jnp.where(uvn < EPSILON, 0.0, 1.0).reshape(M, 1)       # zero i==j pairs (L>0 filters)
    y1 = (uv / (uvn[..., None] + EPSILON)).reshape(M, 3)          # unit_vectors() helper
    y2v = y2(uv).reshape(M, 5)                                    # Y_2 helper

    # per-component Y_lm * mask, replicated od-wide along lanes (mask folded in so the
    # radial kernel needs a single VPU multiply; F00 stays unmasked like the reference)
    ones = jnp.ones((M, 1), jnp.float32)
    ym20 = jnp.concatenate(
        [ones, y1 * mask, y2v * mask, y1 * mask, y1 * mask, y2v * mask], axis=1)   # [M, 20]
    yrep = jnp.repeat(ym20, od, axis=1)                                             # [M, 20*od]

    # --- kernel 1: all six radial filters -> lane-stacked pair tensor F_all ---
    f_all = fused_radial_filters(packed, rbf_flat, yrep)          # [M, 20*od]
    f3 = f_all.reshape(N, N, C)                                   # layout-preserving reshape

    # --- kernel 2: embedding + both conv / SI / nonlinearity layers, fused ---
    s1 = fused_tfn_network(packed, f3, one_hot)                   # [N, 3*od]
    return s1.reshape(N, 3, od)                                   # torch layout [N, 3, od]


def pooling(feat, crystal_atom_idx, carbon_idx):
    """Ragged per-crystal carbon-atom mean pooling (host-side glue)."""
    meaned = []
    for i, idx in enumerate(crystal_atom_idx):
        crystal_fea = feat[jnp.asarray(idx)]
        rows = [crystal_fea[j] for j, flag in enumerate(carbon_idx[i]) if flag == 1]
        carbon_fea = jnp.stack(rows, axis=0)
        meaned.append(jnp.mean(carbon_fea, axis=0, keepdims=True))
    return jnp.concatenate(meaned, axis=0)


# --------------------------------------------------------------------------- main
if __name__ == "__main__":
    N = 8
    NUM_ATOM_TYPES = 4
    OUTPUT_DIM = 8

    key = jax.random.PRNGKey(0)
    k_coords, k_types, k_params = jax.random.split(key, 3)
    coords = jax.random.uniform(k_coords, (N, 3), jnp.float32, 0.0, 2.0)
    atom_types = jax.random.randint(k_types, (N,), 0, NUM_ATOM_TYPES)
    one_hot = jax.nn.one_hot(atom_types, NUM_ATOM_TYPES, dtype=jnp.float32)

    params = init_params(k_params, NUM_ATOM_TYPES, OUTPUT_DIM, RBF_COUNT)
    packed = pack_params(params)            # one-time weight repacking (outside jit)

    # two "crystals" of 4 atoms each; 0/1 flags mark carbon atoms
    crystal_atom_idx = [np.array([0, 1, 2, 3]), np.array([4, 5, 6, 7])]
    carbon_idx = [[1, 0, 1, 0], [0, 1, 1, 1]]

    feat = jax.jit(tfn_forward)(packed, coords, one_hot)             # [N, 3, OUTPUT_DIM]
    predicted_spectra = pooling(feat, crystal_atom_idx, carbon_idx)  # [2, 3, OUTPUT_DIM]

    jax.block_until_ready(predicted_spectra)
    assert predicted_spectra.shape == (len(crystal_atom_idx), 3, OUTPUT_DIM)
    print("KERNEL_OK")
</pallas_src>

<mosaic_0001>
module attributes {stable_mosaic.version = 11 : i64} {
  func.func @_radial_kernel(%arg0: i32, %arg1: memref<64x4xf32, #tpu.memory_space<vmem>>, %arg2: memref<4x24xf32, #tpu.memory_space<vmem>>, %arg3: memref<1x24xf32, #tpu.memory_space<vmem>>, %arg4: memref<24x160xf32, #tpu.memory_space<vmem>>, %arg5: memref<1x160xf32, #tpu.memory_space<vmem>>, %arg6: memref<64x160xf32, #tpu.memory_space<vmem>>, %arg7: memref<64x160xf32, #tpu.memory_space<vmem>>) attributes {dimension_semantics = [#tpu.dimension_semantics<parallel>], iteration_bounds = array<i64: 1>, scalar_prefetch = 0 : i64, scratch_operands = 0 : i64, tpu.core_type = #tpu.core_type<tc>, window_params = [{transform_indices = @transform_0, window_bounds = array<i64: 64, 4>}, {pipeline_mode = #tpu.pipeline_mode<synchronous>, transform_indices = @transform_1, window_bounds = array<i64: 4, 24>}, {pipeline_mode = #tpu.pipeline_mode<synchronous>, transform_indices = @transform_2, window_bounds = array<i64: 1, 24>}, {pipeline_mode = #tpu.pipeline_mode<synchronous>, transform_indices = @transform_3, window_bounds = array<i64: 24, 160>}, {pipeline_mode = #tpu.pipeline_mode<synchronous>, transform_indices = @transform_4, window_bounds = array<i64: 1, 160>}, {transform_indices = @transform_5, window_bounds = array<i64: 64, 160>}, {transform_indices = @transform_6, window_bounds = array<i64: 64, 160>}]} {
    %c0 = arith.constant 0 : index
    %c0_0 = arith.constant 0 : index
    %0 = vector.load %arg1[%c0, %c0_0] : memref<64x4xf32, #tpu.memory_space<vmem>>, vector<64x4xf32>
    %c0_1 = arith.constant 0 : index
    %c0_2 = arith.constant 0 : index
    %1 = vector.load %arg2[%c0_1, %c0_2] : memref<4x24xf32, #tpu.memory_space<vmem>>, vector<4x24xf32>
    %cst = arith.constant dense<0.000000e+00> : vector<64x24xf32>
    %2 = tpu.matmul %0, %1, %cst {dimension_numbers = #tpu.dot_dimension_numbers<[1], [0], [0], [1], [0, 0, 1, 1], [], []>} : vector<64x4xf32>, vector<4x24xf32>, vector<64x24xf32> -> vector<64x24xf32>
    %c0_3 = arith.constant 0 : index
    %c0_4 = arith.constant 0 : index
    %3 = vector.load %arg3[%c0_3, %c0_4] : memref<1x24xf32, #tpu.memory_space<vmem>>, vector<1x24xf32>
    %4 = vector.broadcast %3 : vector<1x24xf32> to vector<64x24xf32>
    %5 = arith.addf %2, %4 : vector<64x24xf32>
    %cst_5 = arith.constant 0.000000e+00 : f32
    %6 = vector.broadcast %cst_5 : f32 to vector<64x24xf32>
    %7 = arith.maximumf %5, %6 : vector<64x24xf32>
    %c0_6 = arith.constant 0 : index
    %c0_7 = arith.constant 0 : index
    %8 = vector.load %arg4[%c0_6, %c0_7] : memref<24x160xf32, #tpu.memory_space<vmem>>, vector<24x160xf32>
    %cst_8 = arith.constant dense<0.000000e+00> : vector<64x160xf32>
    %9 = tpu.matmul %7, %8, %cst_8 {dimension_numbers = #tpu.dot_dimension_numbers<[1], [0], [0], [1], [0, 0, 1, 1], [], []>} : vector<64x24xf32>, vector<24x160xf32>, vector<64x160xf32> -> vector<64x160xf32>
    %c0_9 = arith.constant 0 : index
    %c0_10 = arith.constant 0 : index
    %10 = vector.load %arg5[%c0_9, %c0_10] : memref<1x160xf32, #tpu.memory_space<vmem>>, vector<1x160xf32>
    %11 = vector.broadcast %10 : vector<1x160xf32> to vector<64x160xf32>
    %12 = arith.addf %9, %11 : vector<64x160xf32>
    %c0_11 = arith.constant 0 : index
    %c0_12 = arith.constant 0 : index
    %13 = vector.load %arg6[%c0_11, %c0_12] : memref<64x160xf32, #tpu.memory_space<vmem>>, vector<64x160xf32>
    %14 = arith.mulf %12, %13 : vector<64x160xf32>
    %c0_13 = arith.constant 0 : index
    %c0_14 = arith.constant 0 : index
    %15 = vector.load %arg7[%c0_13, %c0_14] : memref<64x160xf32, #tpu.memory_space<vmem>>, vector<64x160xf32>
    tpu.vector_store %arg7[%c0_13, %c0_14], %14 {strides = array<i32>} : memref<64x160xf32, #tpu.memory_space<vmem>>, vector<64x160xf32>,
    return
  }
  func.func @transform_0(%arg0: i32) -> (i32, i32) {
    %c0_i32 = arith.constant 0 : i32
    %c0_i32_0 = arith.constant 0 : i32
    return %arg0, %c0_i32 : i32, i32
  }
  func.func @transform_1(%arg0: i32) -> (i32, i32) {
    %c0_i32 = arith.constant 0 : i32
    %c0_i32_0 = arith.constant 0 : i32
    %c0_i32_1 = arith.constant 0 : i32
    return %c0_i32, %c0_i32_0 : i32, i32
  }
  func.func @transform_2(%arg0: i32) -> (i32, i32) {
    %c0_i32 = arith.constant 0 : i32
    %c0_i32_0 = arith.constant 0 : i32
    %c0_i32_1 = arith.constant 0 : i32
    return %c0_i32, %c0_i32_0 : i32, i32
  }
  func.func @transform_3(%arg0: i32) -> (i32, i32) {
    %c0_i32 = arith.constant 0 : i32
    %c0_i32_0 = arith.constant 0 : i32
    %c0_i32_1 = arith.constant 0 : i32
    return %c0_i32, %c0_i32_0 : i32, i32
  }
  func.func @transform_4(%arg0: i32) -> (i32, i32) {
    %c0_i32 = arith.constant 0 : i32
    %c0_i32_0 = arith.constant 0 : i32
    %c0_i32_1 = arith.constant 0 : i32
    return %c0_i32, %c0_i32_0 : i32, i32
  }
  func.func @transform_5(%arg0: i32) -> (i32, i32) {
    %c0_i32 = arith.constant 0 : i32
    %c0_i32_0 = arith.constant 0 : i32
    return %arg0, %c0_i32 : i32, i32
  }
  func.func @transform_6(%arg0: i32) -> (i32, i32) {
    %c0_i32 = arith.constant 0 : i32
    %c0_i32_0 = arith.constant 0 : i32
    return %arg0, %c0_i32 : i32, i32
  }
}

module attributes {stable_mosaic.version = 11 : i64} {
  func.func @_network_kernel(%arg0: memref<8x8x160xf32, #tpu.memory_space<vmem>>, %arg1: memref<8x160xf32, #tpu.memory_space<vmem>>, %arg2: memref<160x72xf32, #tpu.memory_space<vmem>>, %arg3: memref<1x72xf32, #tpu.memory_space<vmem>>, %arg4: memref<4x72x160xf32, #tpu.memory_space<vmem>>, %arg5: memref<4x160x24xf32, #tpu.memory_space<vmem>>, %arg6: memref<8x4xf32, #tpu.memory_space<vmem>>, %arg7: memref<4x8xf32, #tpu.memory_space<vmem>>, %arg8: memref<1x8xf32, #tpu.memory_space<vmem>>, %arg9: memref<8x24xf32, #tpu.memory_space<vmem>>) attributes {dimension_semantics = [], scalar_prefetch = 0 : i64, scratch_operands = 0 : i64, tpu.core_type = #tpu.core_type<tc>} {
    %c0 = arith.constant 0 : index
    %c0_0 = arith.constant 0 : index
    %c0_1 = arith.constant 0 : index
    %0 = vector.load %arg0[%c0, %c0_0, %c0_1] : memref<8x8x160xf32, #tpu.memory_space<vmem>>, vector<8x8x160xf32>
    %c0_2 = arith.constant 0 : index
    %c0_3 = arith.constant 0 : index
    %1 = vector.load %arg6[%c0_2, %c0_3] : memref<8x4xf32, #tpu.memory_space<vmem>>, vector<8x4xf32>
    %c0_4 = arith.constant 0 : index
    %c0_5 = arith.constant 0 : index
    %2 = vector.load %arg7[%c0_4, %c0_5] : memref<4x8xf32, #tpu.memory_space<vmem>>, vector<4x8xf32>
    %cst = arith.constant dense<0.000000e+00> : vector<8x8xf32>
    %3 = tpu.matmul %1, %2, %cst {dimension_numbers = #tpu.dot_dimension_numbers<[1], [0], [0], [1], [0, 0, 1, 1], [], []>} : vector<8x4xf32>, vector<4x8xf32>, vector<8x8xf32> -> vector<8x8xf32>
    %c0_6 = arith.constant 0 : index
    %c0_7 = arith.constant 0 : index
    %4 = vector.load %arg8[%c0_6, %c0_7] : memref<1x8xf32, #tpu.memory_space<vmem>>, vector<1x8xf32>
    %5 = vector.broadcast %4 : vector<1x8xf32> to vector<8x8xf32>
    %6 = arith.addf %3, %5 : vector<8x8xf32>
    %c0_8 = arith.constant 0 : index
    %c0_9 = arith.constant 0 : index
    %7 = vector.load %arg1[%c0_8, %c0_9] : memref<8x160xf32, #tpu.memory_space<vmem>>, vector<8x160xf32>
    %cst_10 = arith.constant dense<0.000000e+00> : vector<8x160xf32>
    %8 = tpu.matmul %6, %7, %cst_10 {dimension_numbers = #tpu.dot_dimension_numbers<[1], [0], [0], [1], [0, 0, 1, 1], [], []>} : vector<8x8xf32>, vector<8x160xf32>, vector<8x160xf32> -> vector<8x160xf32>
    %9 = vector.shape_cast %8 : vector<8x160xf32> to vector<1x8x160xf32>
    %10 = vector.broadcast %9 : vector<1x8x160xf32> to vector<8x8x160xf32>
    %11 = arith.mulf %0, %10 : vector<8x8x160xf32>
    %cst_11 = arith.constant dense<0.000000e+00> : vector<8x160xf32>
    %12 = vector.multi_reduction <add>, %11, %cst_11 [1] : vector<8x8x160xf32> to vector<8x160xf32>
    %c0_12 = arith.constant 0 : index
    %c0_13 = arith.constant 0 : index
    %13 = vector.load %arg2[%c0_12, %c0_13] : memref<160x72xf32, #tpu.memory_space<vmem>>, vector<160x72xf32>
    %cst_14 = arith.constant dense<0.000000e+00> : vector<8x72xf32>
    %14 = tpu.matmul %12, %13, %cst_14 {dimension_numbers = #tpu.dot_dimension_numbers<[1], [0], [0], [1], [0, 0, 1, 1], [], []>} : vector<8x160xf32>, vector<160x72xf32>, vector<8x72xf32> -> vector<8x72xf32>
    %c0_15 = arith.constant 0 : index
    %c0_16 = arith.constant 0 : index
    %15 = vector.load %arg3[%c0_15, %c0_16] : memref<1x72xf32, #tpu.memory_space<vmem>>, vector<1x72xf32>
    %16 = vector.broadcast %15 : vector<1x72xf32> to vector<8x72xf32>
    %17 = arith.addf %14, %16 : vector<8x72xf32>
    %cst_17 = arith.constant 0.000000e+00 : f32
    %18 = vector.broadcast %cst_17 : f32 to vector<8x72xf32>
    %19 = arith.cmpf ogt, %17, %18 : vector<8x72xf32>
    %cst_18 = arith.constant 0.000000e+00 : f32
    %20 = vector.broadcast %cst_18 : f32 to vector<8x72xf32>
    %21 = arith.minimumf %17, %20 : vector<8x72xf32>
    %22 = math.exp %21 : vector<8x72xf32>
    %cst_19 = arith.constant 1.000000e+00 : f32
    %23 = vector.broadcast %cst_19 : f32 to vector<8x72xf32>
    %24 = arith.subf %22, %23 : vector<8x72xf32>
    %25 = arith.select %19, %17, %24 : vector<8x72xi1>, vector<8x72xf32>
    %cst_20 = arith.constant 0.000000e+00 : f32
    %26 = vector.broadcast %cst_20 : f32 to vector<8x24xf32>
    %c0_21 = arith.constant 0 : index
    %c0_22 = arith.constant 0 : index
    %c0_23 = arith.constant 0 : index
    %27 = vector.load %arg4[%c0_21, %c0_22, %c0_23] : memref<4x72x160xf32, #tpu.memory_space<vmem>>, vector<1x72x160xf32>
    %28 = vector.shape_cast %27 : vector<1x72x160xf32> to vector<72x160xf32>
    %cst_24 = arith.constant dense<0.000000e+00> : vector<8x160xf32>
    %29 = tpu.matmul %25, %28, %cst_24 {dimension_numbers = #tpu.dot_dimension_numbers<[1], [0], [0], [1], [0, 0, 1, 1], [], []>} : vector<8x72xf32>, vector<72x160xf32>, vector<8x160xf32> -> vector<8x160xf32>
    %30 = vector.shape_cast %29 : vector<8x160xf32> to vector<1x8x160xf32>
    %31 = vector.broadcast %30 : vector<1x8x160xf32> to vector<8x8x160xf32>
    %32 = arith.mulf %0, %31 : vector<8x8x160xf32>
    %cst_25 = arith.constant dense<0.000000e+00> : vector<8x160xf32>
    %33 = vector.multi_reduction <add>, %32, %cst_25 [1] : vector<8x8x160xf32> to vector<8x160xf32>
    %c0_26 = arith.constant 0 : index
    %c0_27 = arith.constant 0 : index
    %c0_28 = arith.constant 0 : index
    %34 = vector.load %arg5[%c0_26, %c0_27, %c0_28] : memref<4x160x24xf32, #tpu.memory_space<vmem>>, vector<1x160x24xf32>
    %35 = vector.shape_cast %34 : vector<1x160x24xf32> to vector<160x24xf32>
    %cst_29 = arith.constant dense<0.000000e+00> : vector<8x24xf32>
    %36 = tpu.matmul %33, %35, %cst_29 {dimension_numbers = #tpu.dot_dimension_numbers<[1], [0], [0], [1], [0, 0, 1, 1], [], []>} : vector<8x160xf32>, vector<160x24xf32>, vector<8x24xf32> -> vector<8x24xf32>
    %37 = arith.addf %26, %36 : vector<8x24xf32>
    %c1 = arith.constant 1 : index
    %c0_30 = arith.constant 0 : index
    %c0_31 = arith.constant 0 : index
    %38 = vector.load %arg4[%c1, %c0_30, %c0_31] : memref<4x72x160xf32, #tpu.memory_space<vmem>>, vector<1x72x160xf32>
    %39 = vector.shape_cast %38 : vector<1x72x160xf32> to vector<72x160xf32>
    %cst_32 = arith.constant dense<0.000000e+00> : vector<8x160xf32>
    %40 = tpu.matmul %25, %39, %cst_32 {dimension_numbers = #tpu.dot_dimension_numbers<[1], [0], [0], [1], [0, 0, 1, 1], [], []>} : vector<8x72xf32>, vector<72x160xf32>, vector<8x160xf32> -> vector<8x160xf32>
    %41 = vector.shape_cast %40 : vector<8x160xf32> to vector<1x8x160xf32>
    %42 = vector.broadcast %41 : vector<1x8x160xf32> to vector<8x8x160xf32>
    %43 = arith.mulf %0, %42 : vector<8x8x160xf32>
    %cst_33 = arith.constant dense<0.000000e+00> : vector<8x160xf32>
    %44 = vector.multi_reduction <add>, %43, %cst_33 [1] : vector<8x8x160xf32> to vector<8x160xf32>
    %c1_34 = arith.constant 1 : index
    %c0_35 = arith.constant 0 : index
    %c0_36 = arith.constant 0 : index
    %45 = vector.load %arg5[%c1_34, %c0_35, %c0_36] : memref<4x160x24xf32, #tpu.memory_space<vmem>>, vector<1x160x24xf32>
    %46 = vector.shape_cast %45 : vector<1x160x24xf32> to vector<160x24xf32>
    %cst_37 = arith.constant dense<0.000000e+00> : vector<8x24xf32>
    %47 = tpu.matmul %44, %46, %cst_37 {dimension_numbers = #tpu.dot_dimension_numbers<[1], [0], [0], [1], [0, 0, 1, 1], [], []>} : vector<8x160xf32>, vector<160x24xf32>, vector<8x24xf32> -> vector<8x24xf32>
    %48 = arith.addf %37, %47 : vector<8x24xf32>
    %c2 = arith.constant 2 : index
    %c0_38 = arith.constant 0 : index
    %c0_39 = arith.constant 0 : index
    %49 = vector.load %arg4[%c2, %c0_38, %c0_39] : memref<4x72x160xf32, #tpu.memory_space<vmem>>, vector<1x72x160xf32>
    %50 = vector.shape_cast %49 : vector<1x72x160xf32> to vector<72x160xf32>
    %cst_40 = arith.constant dense<0.000000e+00> : vector<8x160xf32>
    %51 = tpu.matmul %25, %50, %cst_40 {dimension_numbers = #tpu.dot_dimension_numbers<[1], [0], [0], [1], [0, 0, 1, 1], [], []>} : vector<8x72xf32>, vector<72x160xf32>, vector<8x160xf32> -> vector<8x160xf32>
    %52 = vector.shape_cast %51 : vector<8x160xf32> to vector<1x8x160xf32>
    %53 = vector.broadcast %52 : vector<1x8x160xf32> to vector<8x8x160xf32>
    %54 = arith.mulf %0, %53 : vector<8x8x160xf32>
    %cst_41 = arith.constant dense<0.000000e+00> : vector<8x160xf32>
    %55 = vector.multi_reduction <add>, %54, %cst_41 [1] : vector<8x8x160xf32> to vector<8x160xf32>
    %c2_42 = arith.constant 2 : index
    %c0_43 = arith.constant 0 : index
    %c0_44 = arith.constant 0 : index
    %56 = vector.load %arg5[%c2_42, %c0_43, %c0_44] : memref<4x160x24xf32, #tpu.memory_space<vmem>>, vector<1x160x24xf32>
    %57 = vector.shape_cast %56 : vector<1x160x24xf32> to vector<160x24xf32>
    %cst_45 = arith.constant dense<0.000000e+00> : vector<8x24xf32>
    %58 = tpu.matmul %55, %57, %cst_45 {dimension_numbers = #tpu.dot_dimension_numbers<[1], [0], [0], [1], [0, 0, 1, 1], [], []>} : vector<8x160xf32>, vector<160x24xf32>, vector<8x24xf32> -> vector<8x24xf32>
    %59 = arith.addf %48, %58 : vector<8x24xf32>
    %c3 = arith.constant 3 : index
    %c0_46 = arith.constant 0 : index
    %c0_47 = arith.constant 0 : index
    %60 = vector.load %arg4[%c3, %c0_46, %c0_47] : memref<4x72x160xf32, #tpu.memory_space<vmem>>, vector<1x72x160xf32>
    %61 = vector.shape_cast %60 : vector<1x72x160xf32> to vector<72x160xf32>
    %cst_48 = arith.constant dense<0.000000e+00> : vector<8x160xf32>
    %62 = tpu.matmul %25, %61, %cst_48 {dimension_numbers = #tpu.dot_dimension_numbers<[1], [0], [0], [1], [0, 0, 1, 1], [], []>} : vector<8x72xf32>, vector<72x160xf32>, vector<8x160xf32> -> vector<8x160xf32>
    %63 = vector.shape_cast %62 : vector<8x160xf32> to vector<1x8x160xf32>
    %64 = vector.broadcast %63 : vector<1x8x160xf32> to vector<8x8x160xf32>
    %65 = arith.mulf %0, %64 : vector<8x8x160xf32>
    %cst_49 = arith.constant dense<0.000000e+00> : vector<8x160xf32>
    %66 = vector.multi_reduction <add>, %65, %cst_49 [1] : vector<8x8x160xf32> to vector<8x160xf32>
    %c3_50 = arith.constant 3 : index
    %c0_51 = arith.constant 0 : index
    %c0_52 = arith.constant 0 : index
    %67 = vector.load %arg5[%c3_50, %c0_51, %c0_52] : memref<4x160x24xf32, #tpu.memory_space<vmem>>, vector<1x160x24xf32>
    %68 = vector.shape_cast %67 : vector<1x160x24xf32> to vector<160x24xf32>
    %cst_53 = arith.constant dense<0.000000e+00> : vector<8x24xf32>
    %69 = tpu.matmul %66, %68, %cst_53 {dimension_numbers = #tpu.dot_dimension_numbers<[1], [0], [0], [1], [0, 0, 1, 1], [], []>} : vector<8x160xf32>, vector<160x24xf32>, vector<8x24xf32> -> vector<8x24xf32>
    %70 = arith.addf %59, %69 : vector<8x24xf32>
    %c0_54 = arith.constant 0 : index
    %c0_55 = arith.constant 0 : index
    %71 = vector.load %arg9[%c0_54, %c0_55] : memref<8x24xf32, #tpu.memory_space<vmem>>, vector<8x24xf32>
    tpu.vector_store %arg9[%c0_54, %c0_55], %70 {strides = array<i32>} : memref<8x24xf32, #tpu.memory_space<vmem>>, vector<8x24xf32>,
    return
  }
}

</mosaic_0001>

<llo_original>
// kernel: tfn_forward.2
$region0: #{tfn_forward.2}
  #allocation0 [shape = 'u32[]', space=smem, size = 0x4, offset = 0x4, fixed_abs, tag = 'smem constant byte address 0x4 - core index']
  #allocation1 [shape = 'u32[144,128]{1,0:T(1,128)}', space=vmem, size = 0x12000, scoped, tag = 'internal scratch']
  %s0 = inlined_call_operand.vmem [shape: f32[64,4], index: 0, kind: input, shape index: {}]
  %s1 = inlined_call_operand.vmem [shape: f32[4,24], index: 1, kind: input, shape index: {}]
  %s2 = inlined_call_operand.vmem [shape: f32[1,24], index: 2, kind: input, shape index: {}]
  %s3 = inlined_call_operand.vmem [shape: f32[24,160], index: 3, kind: input, shape index: {}]
  %s4 = inlined_call_operand.vmem [shape: f32[1,160], index: 4, kind: input, shape index: {}]
  %s5 = inlined_call_operand.vmem [shape: f32[64,160], index: 5, kind: input, shape index: {}]
  %s6 = inlined_call_operand.vmem [shape: f32[64,160], index: 6, kind: output, shape index: {}]
  %s7 = sld [smem:[#allocation0]]
  $region34: #{tfn_forward.2} parent=0
    _
  %s9 = ssub.s32 1, %s7
  %s10 = scalar_select 0, %s9, %s7
  // Predicated region
  $region2: #{tfn_forward.2} parent=0 // pred_check
    _
  $region3: #{tfn_forward.2} parent=0 // pred_check_branch
    %12 = sbr.rel (0) target = $region5
  $region4: #{tfn_forward.2} parent=0 // pred_region
    _
  $region5: #{tfn_forward.2} parent=0 // pred_fallthru
    _
  // Predicated region
  $region6: #{tfn_forward.2} parent=0 // pred_check
    _
  $region7: #{tfn_forward.2} parent=0 // pred_check_branch
    %14 = sbr.rel (0) target = $region9
  $region8: #{tfn_forward.2} parent=0 // pred_region
    _
  $region9: #{tfn_forward.2} parent=0 // pred_fallthru
    _
  // Predicated region
  $region10: #{tfn_forward.2} parent=0 // pred_check
    _
  $region11: #{tfn_forward.2} parent=0 // pred_check_branch
    %16 = sbr.rel (0) target = $region13
  $region12: #{tfn_forward.2} parent=0 // pred_region
    _
  $region13: #{tfn_forward.2} parent=0 // pred_fallthru
    _
  // Predicated region
  $region14: #{tfn_forward.2} parent=0 // pred_check
    _
  $region15: #{tfn_forward.2} parent=0 // pred_check_branch
    %18 = sbr.rel (0) target = $region17
  $region16: #{tfn_forward.2} parent=0 // pred_region
    _
  $region17: #{tfn_forward.2} parent=0 // pred_fallthru
    _
  // Predicated region
  $region18: #{tfn_forward.2} parent=0 // pred_check
    _
  $region19: #{tfn_forward.2} parent=0 // pred_check_branch
    %20 = sbr.rel (0) target = $region21
  $region20: #{tfn_forward.2} parent=0 // pred_region
    _
  $region21: #{tfn_forward.2} parent=0 // pred_fallthru
    _
  // Predicated region
  $region22: #{tfn_forward.2} parent=0 // pred_check
    _
  $region23: #{tfn_forward.2} parent=0 // pred_check_branch
    %22 = sbr.rel (0) target = $region25
  $region24: #{tfn_forward.2} parent=0 // pred_region
    _
  $region25: #{tfn_forward.2} parent=0 // pred_fallthru
    _
  %v23 = vld [vmem:[%s0] sm:$0xff]
  %v24 = vld [vmem:[%s0 + $0x8] sm:$0xff]
  %v25 = vld [vmem:[%s0 + $0x10] sm:$0xff]
  %v26 = vld [vmem:[%s0 + $0x18] sm:$0xff]
  %v27 = vld [vmem:[%s0 + $0x20] sm:$0xff]
  %v28 = vld [vmem:[%s0 + $0x28] sm:$0xff]
  %v29 = vld [vmem:[%s0 + $0x30] sm:$0xff]
  %v30 = vld [vmem:[%s0 + $0x38] sm:$0xff]
  %v31 = vld [vmem:[%s1] sm:$0xf]
  %v32 = vld [vmem:[%s2] sm:$0x1]
  %v34 = vlaneseq
  %v35 = vshrl.u32 %v34, 7
  %v36 = vsub.s32 0, %v35
  %v37 = vrot.slane %v32, %v36
  %vm39 = vcmask 31744
  %v41 = vsel %vm39, %v23, 0
  %v44 = vsel %vm39, %v24, 0
  %v47 = vsel %vm39, %v25, 0
  %v50 = vsel %vm39, %v26, 0
  %v53 = vsel %vm39, %v27, 0
  %v56 = vsel %vm39, %v28, 0
  %v59 = vsel %vm39, %v29, 0
  %v62 = vsel %vm39, %v30, 0
  %vm64 = vcmask 1043456
  %v66 = vsel %vm64, %v31, 0
  %68 = vmatprep.subr.mxu0 0.0
  %69 = vmatpush1.msra.mxu0 0.0
  %70 = vmatprep.subr.mxu0 0.0
  %71 = vmatpush1.msra.mxu0 0.0
  %72 = vmatprep.subr.mxu0 0.0
  %73 = vmatpush1.msra.mxu0 0.0
  %74 = vmatprep.subr.mxu0 0.0
  %75 = vmatpush1.msra.mxu0 0.0
  %76 = vmatprep.subr.mxu0 0.0
  %77 = vmatpush1.msra.mxu0 0.0
  %78 = vmatprep.subr.mxu0 0.0
  %79 = vmatpush1.msra.mxu0 0.0
  %80 = vmatprep.subr.mxu0 0.0
  %81 = vmatpush1.msra.mxu0 0.0
  %82 = vmatprep.subr.mxu0 0.0
  %83 = vmatpush1.msra.mxu0 0.0
  %84 = vmatprep.subr.mxu0 0.0
  %85 = vmatpush1.msra.mxu0 0.0
  %86 = vmatprep.subr.mxu0 0.0
  %87 = vmatpush1.msra.mxu0 0.0
  %88 = vmatprep.subr.mxu0 0.0
  %89 = vmatpush1.msra.mxu0 0.0
  %90 = vmatprep.subr.mxu0 0.0
  %91 = vmatpush1.msra.mxu0 0.0
  %92 = vmatprep.subr.mxu0 0.0
  %93 = vmatpush1.msra.mxu0 0.0
  %94 = vmatprep.subr.mxu0 0.0
  %95 = vmatpush1.msra.mxu0 0.0
  %96 = vmatprep.subr.mxu0 0.0
  %97 = vmatpush1.msra.mxu0 0.0
  %98 = vmatprep.subr.mxu0 0.0
  %99 = vmatpush1.msra.mxu0 %v66
  %100 = vmatprep.subr.mxu0 0.0
  %101 = vmatpush2.msra.mxu0 0.0
  %102 = vmatprep.subr.mxu0 0.0
  %103 = vmatpush2.msra.mxu0 0.0
  %104 = vmatprep.subr.mxu0 0.0
  %105 = vmatpush2.msra.mxu0 0.0
  %106 = vmatprep.subr.mxu0 0.0
  %107 = vmatpush2.msra.mxu0 0.0
  %108 = vmatprep.subr.mxu0 0.0
  %109 = vmatpush2.msra.mxu0 0.0
  %110 = vmatprep.subr.mxu0 0.0
  %111 = vmatpush2.msra.mxu0 0.0
  %112 = vmatprep.subr.mxu0 0.0
  %113 = vmatpush2.msra.mxu0 0.0
  %114 = vmatprep.subr.mxu0 0.0
  %115 = vmatpush2.msra.mxu0 0.0
  %116 = vmatprep.subr.mxu0 0.0
  %117 = vmatpush2.msra.mxu0 0.0
  %118 = vmatprep.subr.mxu0 0.0
  %119 = vmatpush2.msra.mxu0 0.0
  %120 = vmatprep.subr.mxu0 0.0
  %121 = vmatpush2.msra.mxu0 0.0
  %122 = vmatprep.subr.mxu0 0.0
  %123 = vmatpush2.msra.mxu0 0.0
  %124 = vmatprep.subr.mxu0 0.0
  %125 = vmatpush2.msra.mxu0 0.0
  %126 = vmatprep.subr.mxu0 0.0
  %127 = vmatpush2.msra.mxu0 0.0
  %128 = vmatprep.subr.mxu0 0.0
  %129 = vmatpush2.msra.mxu0 0.0
  %130 = vmatprep.subr.mxu0 0.0
  %131 = vmatpush2.msra.mxu0 0.0
  %132 = vmatprep.mubr.f32.mxu0 0.0
  %133 = vmatmul.mubr.f32.gmra.mxu0 %v41
  %v134 = vpop.f32.mrf.mxu0
  %v135 = vadd.f32 %v37, %v134
  %v136 = vpop.f32.mrf.mxu0
  %137 = vmatprep.mubr.f32.mxu0 0.0
  %138 = vmatmul.mubr.f32.gmra.mxu0 %v44
  %v139 = vpop.f32.mrf.mxu0
  %v140 = vadd.f32 %v37, %v139
  %v141 = vpop.f32.mrf.mxu0
  %142 = vmatprep.mubr.f32.mxu0 0.0
  %143 = vmatmul.mubr.f32.gmra.mxu0 %v47
  %v144 = vpop.f32.mrf.mxu0
  %v145 = vadd.f32 %v37, %v144
  %v146 = vpop.f32.mrf.mxu0
  %147 = vmatprep.mubr.f32.mxu0 0.0
  %148 = vmatmul.mubr.f32.gmra.mxu0 %v50
  %v149 = vpop.f32.mrf.mxu0
  %v150 = vadd.f32 %v37, %v149
  %v151 = vpop.f32.mrf.mxu0
  %152 = vmatprep.mubr.f32.mxu0 0.0
  %153 = vmatmul.mubr.f32.gmra.mxu0 %v53
  %v154 = vpop.f32.mrf.mxu0
  %v155 = vadd.f32 %v37, %v154
  %v156 = vpop.f32.mrf.mxu0
  %157 = vmatprep.mubr.f32.mxu0 0.0
  %158 = vmatmul.mubr.f32.gmra.mxu0 %v56
  %v159 = vpop.f32.mrf.mxu0
  %v160 = vadd.f32 %v37, %v159
  %v161 = vpop.f32.mrf.mxu0
  %162 = vmatprep.mubr.f32.mxu0 0.0
  %163 = vmatmul.mubr.f32.gmra.mxu0 %v59
  %v164 = vpop.f32.mrf.mxu0
  %v165 = vadd.f32 %v37, %v164
  %v166 = vpop.f32.mrf.mxu0
  %167 = vmatprep.mubr.f32.mxu0 0.0
  %168 = vmatmul.mubr.f32.gmra.mxu0 %v62
  %v169 = vpop.f32.mrf.mxu0
  %v170 = vadd.f32 %v37, %v169
  %v171 = vpop.f32.mrf.mxu0
  %172 = vdwg.mxu0
  %v173 = vmax.f32 %v135, 0.0
  %v174 = vmax.f32 %v140, 0.0
  %v175 = vmax.f32 %v145, 0.0
  %v176 = vmax.f32 %v150, 0.0
  %v177 = vmax.f32 %v155, 0.0
  %v178 = vmax.f32 %v160, 0.0
  %v179 = vmax.f32 %v165, 0.0
  %v180 = vmax.f32 %v170, 0.0
  %v181 = vld [vmem:[%s3] sm:$0xff]
  %v182 = vld [vmem:[%s3 + $0x8] sm:$0xff]
  %v183 = vld [vmem:[%s3 + $0x10] sm:$0xff]
  %v184 = vld [vmem:[%s3 + $0x18] sm:$0xff]
  %v185 = vld [vmem:[%s3 + $0x20] sm:$0xff]
  %v186 = vld [vmem:[%s3 + $0x28] sm:$0xff]
  %v187 = vld [vmem:[%s4] sm:$0x3]
  %v189 = vlaneseq
  %v190 = vshrl.u32 %v189, 7
  %v191 = vsub.s32 0, %v190
  %v192 = vrot.slane %v187, %v191
  %v193 = vlaneseq
  %v194 = vshrl.u32 %v193, 7
  %v195 = vsub.s32 1, %v194
  %v196 = vrot.slane %v187, %v195
  %vm199 = vcmask 195584
  %v201 = vsel %vm199, %v173, 0
  %v204 = vsel %vm199, %v174, 0
  %v207 = vsel %vm199, %v175, 0
  %v210 = vsel %vm199, %v176, 0
  %v213 = vsel %vm199, %v177, 0
  %v216 = vsel %vm199, %v178, 0
  %v219 = vsel %vm199, %v179, 0
  %v222 = vsel %vm199, %v180, 0
  %224 = vmatprep.subr.mxu0 0.0
  %225 = vmatpush1.msra.mxu0 0.0
  %226 = vmatprep.subr.mxu0 0.0
  %227 = vmatpush1.msra.mxu0 0.0
  %228 = vmatprep.subr.mxu0 0.0
  %229 = vmatpush1.msra.mxu0 0.0
  %230 = vmatprep.subr.mxu0 0.0
  %231 = vmatpush1.msra.mxu0 0.0
  %232 = vmatprep.subr.mxu0 0.0
  %233 = vmatpush1.msra.mxu0 0.0
  %234 = vmatprep.subr.mxu0 0.0
  %235 = vmatpush1.msra.mxu0 0.0
  %236 = vmatprep.subr.mxu0 0.0
  %237 = vmatpush1.msra.mxu0 0.0
  %238 = vmatprep.subr.mxu0 0.0
  %239 = vmatpush1.msra.mxu0 0.0
  %240 = vmatprep.subr.mxu0 0.0
  %241 = vmatpush1.msra.mxu0 0.0
  %242 = vmatprep.subr.mxu0 0.0
  %243 = vmatpush1.msra.mxu0 0.0
  %244 = vmatprep.subr.mxu0 0.0
  %245 = vmatpush1.msra.mxu0 0.0
  %246 = vmatprep.subr.mxu0 0.0
  %247 = vmatpush1.msra.mxu0 0.0
  %248 = vmatprep.subr.mxu0 0.0
  %249 = vmatpush1.msra.mxu0 0.0
  %250 = vmatprep.subr.mxu0 %v186
  %251 = vmatpush1.msra.mxu0 %v185
  %252 = vmatprep.subr.mxu0 %v184
  %253 = vmatpush1.msra.mxu0 %v183
  %254 = vmatprep.subr.mxu0 %v182
  %255 = vmatpush1.msra.mxu0 %v181
  %256 = vmatprep.subr.mxu0 0.0
  %257 = vmatpush2.msra.mxu0 0.0
  %258 = vmatprep.subr.mxu0 0.0
  %259 = vmatpush2.msra.mxu0 0.0
  %260 = vmatprep.subr.mxu0 0.0
  %261 = vmatpush2.msra.mxu0 0.0
  %262 = vmatprep.subr.mxu0 0.0
  %263 = vmatpush2.msra.mxu0 0.0
  %264 = vmatprep.subr.mxu0 0.0
  %265 = vmatpush2.msra.mxu0 0.0
  %266 = vmatprep.subr.mxu0 0.0
  %267 = vmatpush2.msra.mxu0 0.0
  %268 = vmatprep.subr.mxu0 0.0
  %269 = vmatpush2.msra.mxu0 0.0
  %270 = vmatprep.subr.mxu0 0.0
  %271 = vmatpush2.msra.mxu0 0.0
  %272 = vmatprep.subr.mxu0 0.0
  %273 = vmatpush2.msra.mxu0 0.0
  %274 = vmatprep.subr.mxu0 0.0
  %275 = vmatpush2.msra.mxu0 0.0
  %276 = vmatprep.subr.mxu0 0.0
  %277 = vmatpush2.msra.mxu0 0.0
  %278 = vmatprep.subr.mxu0 0.0
  %279 = vmatpush2.msra.mxu0 0.0
  %280 = vmatprep.subr.mxu0 0.0
  %281 = vmatpush2.msra.mxu0 0.0
  %282 = vmatprep.subr.mxu0 0.0
  %283 = vmatpush2.msra.mxu0 0.0
  %284 = vmatprep.subr.mxu0 0.0
  %285 = vmatpush2.msra.mxu0 0.0
  %286 = vmatprep.subr.mxu0 0.0
  %287 = vmatpush2.msra.mxu0 0.0
  %288 = vmatprep.mubr.f32.mxu0 0.0
  %289 = vmatmul.mubr.f32.gmra.mxu0 %v201
  %v290 = vpop.f32.mrf.mxu0
  %v291 = vadd.f32 %v192, %v290
  %v292 = vpop.f32.mrf.mxu0
  %v293 = vadd.f32 %v196, %v292
  %294 = vmatprep.mubr.f32.mxu0 0.0
  %295 = vmatmul.mubr.f32.gmra.mxu0 %v204
  %v296 = vpop.f32.mrf.mxu0
  %v297 = vadd.f32 %v192, %v296
  %v298 = vpop.f32.mrf.mxu0
  %v299 = vadd.f32 %v196, %v298
  %300 = vmatprep.mubr.f32.mxu0 0.0
  %301 = vmatmul.mubr.f32.gmra.mxu0 %v207
  %v302 = vpop.f32.mrf.mxu0
  %v303 = vadd.f32 %v192, %v302
  %v304 = vpop.f32.mrf.mxu0
  %v305 = vadd.f32 %v196, %v304
  %306 = vmatprep.mubr.f32.mxu0 0.0
  %307 = vmatmul.mubr.f32.gmra.mxu0 %v210
  %v308 = vpop.f32.mrf.mxu0
  %v309 = vadd.f32 %v192, %v308
  %v310 = vpop.f32.mrf.mxu0
  %v311 = vadd.f32 %v196, %v310
  %312 = vmatprep.mubr.f32.mxu0 0.0
  %313 = vmatmul.mubr.f32.gmra.mxu0 %v213
  %v314 = vpop.f32.mrf.mxu0
  %v315 = vadd.f32 %v192, %v314
  %v316 = vpop.f32.mrf.mxu0
  %v317 = vadd.f32 %v196, %v316
  %318 = vmatprep.mubr.f32.mxu0 0.0
  %319 = vmatmul.mubr.f32.gmra.mxu0 %v216
  %v320 = vpop.f32.mrf.mxu0
  %v321 = vadd.f32 %v192, %v320
  %v322 = vpop.f32.mrf.mxu0
  %v323 = vadd.f32 %v196, %v322
  %324 = vmatprep.mubr.f32.mxu0 0.0
  %325 = vmatmul.mubr.f32.gmra.mxu0 %v219
  %v326 = vpop.f32.mrf.mxu0
  %v327 = vadd.f32 %v192, %v326
  %v328 = vpop.f32.mrf.mxu0
  %v329 = vadd.f32 %v196, %v328
  %330 = vmatprep.mubr.f32.mxu0 0.0
  %331 = vmatmul.mubr.f32.gmra.mxu0 %v222
  %v332 = vpop.f32.mrf.mxu0
  %v333 = vadd.f32 %v192, %v332
  %v334 = vpop.f32.mrf.mxu0
  %v335 = vadd.f32 %v196, %v334
  %336 = vdwg.mxu0
  %v337 = vld [vmem:[%s5] sm:$0xff]
  %v338 = vld [vmem:[%s5 + $0x8] sm:$0xff]
  %v339 = vld [vmem:[%s5 + $0x10] sm:$0xff]
  %v340 = vld [vmem:[%s5 + $0x18] sm:$0xff]
  %v341 = vld [vmem:[%s5 + $0x20] sm:$0xff]
  %v342 = vld [vmem:[%s5 + $0x28] sm:$0xff]
  %v343 = vld [vmem:[%s5 + $0x30] sm:$0xff]
  %v344 = vld [vmem:[%s5 + $0x38] sm:$0xff]
  %v345 = vld [vmem:[%s5 + $0x40] sm:$0xff]
  %v346 = vld [vmem:[%s5 + $0x48] sm:$0xff]
  %v347 = vld [vmem:[%s5 + $0x50] sm:$0xff]
  %v348 = vld [vmem:[%s5 + $0x58] sm:$0xff]
  %v349 = vld [vmem:[%s5 + $0x60] sm:$0xff]
  %v350 = vld [vmem:[%s5 + $0x68] sm:$0xff]
  %v351 = vld [vmem:[%s5 + $0x70] sm:$0xff]
  %v352 = vld [vmem:[%s5 + $0x78] sm:$0xff]
  %v353 = vmul.f32 %v291, %v337
  %v354 = vmul.f32 %v293, %v338
  %v355 = vmul.f32 %v297, %v339
  %v356 = vmul.f32 %v299, %v340
  %v357 = vmul.f32 %v303, %v341
  %v358 = vmul.f32 %v305, %v342
  %v359 = vmul.f32 %v309, %v343
  %v360 = vmul.f32 %v311, %v344
  %v361 = vmul.f32 %v315, %v345
  %v362 = vmul.f32 %v317, %v346
  %v363 = vmul.f32 %v321, %v347
  %v364 = vmul.f32 %v323, %v348
  %v365 = vmul.f32 %v327, %v349
  %v366 = vmul.f32 %v329, %v350
  %v367 = vmul.f32 %v333, %v351
  %v368 = vmul.f32 %v335, %v352
  %369 = vst [vmem:[%s6] sm:$0xff] %v353
  %vm370 = vcmask 261120
  %371 = vst.msk [vmem:[%s6 + $0x8] sm:$0xff] %vm370, %v354
  %372 = vst [vmem:[%s6 + $0x10] sm:$0xff] %v355
  %373 = vst.msk [vmem:[%s6 + $0x18] sm:$0xff] %vm370, %v356
  %374 = vst [vmem:[%s6 + $0x20] sm:$0xff] %v357
  %375 = vst.msk [vmem:[%s6 + $0x28] sm:$0xff] %vm370, %v358
  %376 = vst [vmem:[%s6 + $0x30] sm:$0xff] %v359
  %377 = vst.msk [vmem:[%s6 + $0x38] sm:$0xff] %vm370, %v360
  %378 = vst [vmem:[%s6 + $0x40] sm:$0xff] %v361
  %379 = vst.msk [vmem:[%s6 + $0x48] sm:$0xff] %vm370, %v362
  %380 = vst [vmem:[%s6 + $0x50] sm:$0xff] %v363
  %381 = vst.msk [vmem:[%s6 + $0x58] sm:$0xff] %vm370, %v364
  %382 = vst [vmem:[%s6 + $0x60] sm:$0xff] %v365
  %383 = vst.msk [vmem:[%s6 + $0x68] sm:$0xff] %vm370, %v366
  %384 = vst [vmem:[%s6 + $0x70] sm:$0xff] %v367
  %385 = vst.msk [vmem:[%s6 + $0x78] sm:$0xff] %vm370, %v368
  // Predicated region
  $region26: #{tfn_forward.2} parent=0 // pred_check
    _
  $region27: #{tfn_forward.2} parent=0 // pred_check_branch
    %387 = sbr.rel (0) target = $region29
  $region28: #{tfn_forward.2} parent=0 // pred_region
    _
  $region29: #{tfn_forward.2} parent=0 // pred_fallthru
    _
  // Predicated region
  $region30: #{tfn_forward.2} parent=0 // pred_check
    _
  $region31: #{tfn_forward.2} parent=0 // pred_check_branch
    %389 = sbr.rel (0) target = $region33
  $region32: #{tfn_forward.2} parent=0 // pred_region
    _
  $region33: #{tfn_forward.2} parent=0 // pred_fallthru
    _

// kernel: tfn_forward.3
$region0: #{tfn_forward.3}
  #allocation0 [shape = 'u32[]', space=smem, size = 0x4, offset = 0x4, fixed_abs, tag = 'smem constant byte address 0x4 - core index']
  #allocation1 [shape = 'u32[144,128]{1,0:T(1,128)}', space=vmem, size = 0x12000, scoped, tag = 'internal scratch']
  %s0 = inlined_call_operand.vmem [shape: f32[8,8,160], index: 0, kind: input, shape index: {}]
  %s1 = inlined_call_operand.vmem [shape: f32[8,160], index: 1, kind: input, shape index: {}]
  %s2 = inlined_call_operand.vmem [shape: f32[160,72], index: 2, kind: input, shape index: {}]
  %s3 = inlined_call_operand.vmem [shape: f32[1,72], index: 3, kind: input, shape index: {}]
  %s4 = inlined_call_operand.vmem [shape: f32[4,72,160], index: 4, kind: input, shape index: {}]
  %s5 = inlined_call_operand.vmem [shape: f32[4,160,24], index: 5, kind: input, shape index: {}]
  %s6 = inlined_call_operand.vmem [shape: f32[8,4], index: 6, kind: input, shape index: {}]
  %s7 = inlined_call_operand.vmem [shape: f32[4,8], index: 7, kind: input, shape index: {}]
  %s8 = inlined_call_operand.vmem [shape: f32[1,8], index: 8, kind: input, shape index: {}]
  %s9 = inlined_call_operand.vmem [shape: f32[8,24], index: 9, kind: output, shape index: {}]
  %s10 = sld [smem:[#allocation0]]
  $region46: #{tfn_forward.3} parent=0
    _
  %s12 = ssub.s32 1, %s10
  %s13 = scalar_select 0, %s12, %s10
  // Predicated region
  $region2: #{tfn_forward.3} parent=0 // pred_check
    _
  $region3: #{tfn_forward.3} parent=0 // pred_check_branch
    %15 = sbr.rel (0) target = $region5
  $region4: #{tfn_forward.3} parent=0 // pred_region
    _
  $region5: #{tfn_forward.3} parent=0 // pred_fallthru
    _
  // Predicated region
  $region6: #{tfn_forward.3} parent=0 // pred_check
    _
  $region7: #{tfn_forward.3} parent=0 // pred_check_branch
    %17 = sbr.rel (0) target = $region9
  $region8: #{tfn_forward.3} parent=0 // pred_region
    _
  $region9: #{tfn_forward.3} parent=0 // pred_fallthru
    _
  // Predicated region
  $region10: #{tfn_forward.3} parent=0 // pred_check
    _
  $region11: #{tfn_forward.3} parent=0 // pred_check_branch
    %19 = sbr.rel (0) target = $region13
  $region12: #{tfn_forward.3} parent=0 // pred_region
    _
  $region13: #{tfn_forward.3} parent=0 // pred_fallthru
    _
  // Predicated region
  $region14: #{tfn_forward.3} parent=0 // pred_check
    _
  $region15: #{tfn_forward.3} parent=0 // pred_check_branch
    %21 = sbr.rel (0) target = $region17
  $region16: #{tfn_forward.3} parent=0 // pred_region
    _
  $region17: #{tfn_forward.3} parent=0 // pred_fallthru
    _
  // Predicated region
  $region18: #{tfn_forward.3} parent=0 // pred_check
    _
  $region19: #{tfn_forward.3} parent=0 // pred_check_branch
    %23 = sbr.rel (0) target = $region21
  $region20: #{tfn_forward.3} parent=0 // pred_region
    _
  $region21: #{tfn_forward.3} parent=0 // pred_fallthru
    _
  // Predicated region
  $region22: #{tfn_forward.3} parent=0 // pred_check
    _
  $region23: #{tfn_forward.3} parent=0 // pred_check_branch
    %25 = sbr.rel (0) target = $region25
  $region24: #{tfn_forward.3} parent=0 // pred_region
    _
  $region25: #{tfn_forward.3} parent=0 // pred_fallthru
    _
  // Predicated region
  $region26: #{tfn_forward.3} parent=0 // pred_check
    _
  $region27: #{tfn_forward.3} parent=0 // pred_check_branch
    %27 = sbr.rel (0) target = $region29
  $region28: #{tfn_forward.3} parent=0 // pred_region
    _
  $region29: #{tfn_forward.3} parent=0 // pred_fallthru
    _
  // Predicated region
  $region30: #{tfn_forward.3} parent=0 // pred_check
    _
  $region31: #{tfn_forward.3} parent=0 // pred_check_branch
    %29 = sbr.rel (0) target = $region33
  $region32: #{tfn_forward.3} parent=0 // pred_region
    _
  $region33: #{tfn_forward.3} parent=0 // pred_fallthru
    _
  // Predicated region
  $region34: #{tfn_forward.3} parent=0 // pred_check
    _
  $region35: #{tfn_forward.3} parent=0 // pred_check_branch
    %31 = sbr.rel (0) target = $region37
  $region36: #{tfn_forward.3} parent=0 // pred_region
    _
  $region37: #{tfn_forward.3} parent=0 // pred_fallthru
    _
  %v32 = vld [vmem:[%s0] sm:$0xff]
  %v33 = vld [vmem:[%s0 + $0x8] sm:$0xff]
  %v34 = vld [vmem:[%s0 + $0x10] sm:$0xff]
  %v35 = vld [vmem:[%s0 + $0x18] sm:$0xff]
  %v36 = vld [vmem:[%s0 + $0x20] sm:$0xff]
  %v37 = vld [vmem:[%s0 + $0x28] sm:$0xff]
  %v38 = vld [vmem:[%s0 + $0x30] sm:$0xff]
  %v39 = vld [vmem:[%s0 + $0x38] sm:$0xff]
  %v40 = vld [vmem:[%s0 + $0x40] sm:$0xff]
  %v41 = vld [vmem:[%s0 + $0x48] sm:$0xff]
  %v42 = vld [vmem:[%s0 + $0x50] sm:$0xff]
  %v43 = vld [vmem:[%s0 + $0x58] sm:$0xff]
  %v44 = vld [vmem:[%s0 + $0x60] sm:$0xff]
  %v45 = vld [vmem:[%s0 + $0x68] sm:$0xff]
  %v46 = vld [vmem:[%s0 + $0x70] sm:$0xff]
  %v47 = vld [vmem:[%s0 + $0x78] sm:$0xff]
  %v48 = vld [vmem:[%s6] sm:$0xff]
  %v49 = vld [vmem:[%s7] sm:$0xf]
  %v50 = vld [vmem:[%s8] sm:$0x1]
  %v52 = vlaneseq
  %v53 = vshrl.u32 %v52, 7
  %v54 = vsub.s32 0, %v53
  %v55 = vrot.slane %v50, %v54
  %vm57 = vcmask 31744
  %v59 = vsel %vm57, %v48, 0
  %vm61 = vcmask 1043456
  %v63 = vsel %vm61, %v49, 0
  %65 = vmatprep.subr.mxu0 0.0
  %66 = vmatpush1.msra.mxu0 0.0
  %67 = vmatprep.subr.mxu0 0.0
  %68 = vmatpush1.msra.mxu0 0.0
  %69 = vmatprep.subr.mxu0 0.0
  %70 = vmatpush1.msra.mxu0 0.0
  %71 = vmatprep.subr.mxu0 0.0
  %72 = vmatpush1.msra.mxu0 0.0
  %73 = vmatprep.subr.mxu0 0.0
  %74 = vmatpush1.msra.mxu0 0.0
  %75 = vmatprep.subr.mxu0 0.0
  %76 = vmatpush1.msra.mxu0 0.0
  %77 = vmatprep.subr.mxu0 0.0
  %78 = vmatpush1.msra.mxu0 0.0
  %79 = vmatprep.subr.mxu0 0.0
  %80 = vmatpush1.msra.mxu0 0.0
  %81 = vmatprep.subr.mxu0 0.0
  %82 = vmatpush1.msra.mxu0 0.0
  %83 = vmatprep.subr.mxu0 0.0
  %84 = vmatpush1.msra.mxu0 0.0
  %85 = vmatprep.subr.mxu0 0.0
  %86 = vmatpush1.msra.mxu0 0.0
  %87 = vmatprep.subr.mxu0 0.0
  %88 = vmatpush1.msra.mxu0 0.0
  %89 = vmatprep.subr.mxu0 0.0
  %90 = vmatpush1.msra.mxu0 0.0
  %91 = vmatprep.subr.mxu0 0.0
  %92 = vmatpush1.msra.mxu0 0.0
  %93 = vmatprep.subr.mxu0 0.0
  %94 = vmatpush1.msra.mxu0 0.0
  %95 = vmatprep.subr.mxu0 0.0
  %96 = vmatpush1.msra.mxu0 %v63
  %97 = vmatprep.subr.mxu0 0.0
  %98 = vmatpush2.msra.mxu0 0.0
  %99 = vmatprep.subr.mxu0 0.0
  %100 = vmatpush2.msra.mxu0 0.0
  %101 = vmatprep.subr.mxu0 0.0
  %102 = vmatpush2.msra.mxu0 0.0
  %103 = vmatprep.subr.mxu0 0.0
  %104 = vmatpush2.msra.mxu0 0.0
  %105 = vmatprep.subr.mxu0 0.0
  %106 = vmatpush2.msra.mxu0 0.0
  %107 = vmatprep.subr.mxu0 0.0
  %108 = vmatpush2.msra.mxu0 0.0
  %109 = vmatprep.subr.mxu0 0.0
  %110 = vmatpush2.msra.mxu0 0.0
  %111 = vmatprep.subr.mxu0 0.0
  %112 = vmatpush2.msra.mxu0 0.0
  %113 = vmatprep.subr.mxu0 0.0
  %114 = vmatpush2.msra.mxu0 0.0
  %115 = vmatprep.subr.mxu0 0.0
  %116 = vmatpush2.msra.mxu0 0.0
  %117 = vmatprep.subr.mxu0 0.0
  %118 = vmatpush2.msra.mxu0 0.0
  %119 = vmatprep.subr.mxu0 0.0
  %120 = vmatpush2.msra.mxu0 0.0
  %121 = vmatprep.subr.mxu0 0.0
  %122 = vmatpush2.msra.mxu0 0.0
  %123 = vmatprep.subr.mxu0 0.0
  %124 = vmatpush2.msra.mxu0 0.0
  %125 = vmatprep.subr.mxu0 0.0
  %126 = vmatpush2.msra.mxu0 0.0
  %127 = vmatprep.subr.mxu0 0.0
  %128 = vmatpush2.msra.mxu0 0.0
  %129 = vmatprep.mubr.f32.mxu0 0.0
  %130 = vmatmul.mubr.f32.gmra.mxu0 %v59
  %v131 = vpop.f32.mrf.mxu0
  %v132 = vadd.f32 %v55, %v131
  %v133 = vpop.f32.mrf.mxu0
  %134 = vdwg.mxu0
  %v135 = vld [vmem:[%s1] sm:$0xff]
  %v136 = vld [vmem:[%s1 + $0x8] sm:$0xff]
  %vm137 = vcmask 64512
  %v139 = vsel %vm137, %v132, 0
  %141 = vmatprep.subr.mxu0 0.0
  %142 = vmatpush1.msra.mxu0 0.0
  %143 = vmatprep.subr.mxu0 0.0
  %144 = vmatpush1.msra.mxu0 0.0
  %145 = vmatprep.subr.mxu0 0.0
  %146 = vmatpush1.msra.mxu0 0.0
  %147 = vmatprep.subr.mxu0 0.0
  %148 = vmatpush1.msra.mxu0 0.0
  %149 = vmatprep.subr.mxu0 0.0
  %150 = vmatpush1.msra.mxu0 0.0
  %151 = vmatprep.subr.mxu0 0.0
  %152 = vmatpush1.msra.mxu0 0.0
  %153 = vmatprep.subr.mxu0 0.0
  %154 = vmatpush1.msra.mxu0 0.0
  %155 = vmatprep.subr.mxu0 0.0
  %156 = vmatpush1.msra.mxu0 0.0
  %157 = vmatprep.subr.mxu0 0.0
  %158 = vmatpush1.msra.mxu0 0.0
  %159 = vmatprep.subr.mxu0 0.0
  %160 = vmatpush1.msra.mxu0 0.0
  %161 = vmatprep.subr.mxu0 0.0
  %162 = vmatpush1.msra.mxu0 0.0
  %163 = vmatprep.subr.mxu0 0.0
  %164 = vmatpush1.msra.mxu0 0.0
  %165 = vmatprep.subr.mxu0 0.0
  %166 = vmatpush1.msra.mxu0 0.0
  %167 = vmatprep.subr.mxu0 0.0
  %168 = vmatpush1.msra.mxu0 0.0
  %169 = vmatprep.subr.mxu0 0.0
  %170 = vmatpush1.msra.mxu0 0.0
  %171 = vmatprep.subr.mxu0 %v136
  %172 = vmatpush1.msra.mxu0 %v135
  %173 = vmatprep.subr.mxu0 0.0
  %174 = vmatpush2.msra.mxu0 0.0
  %175 = vmatprep.subr.mxu0 0.0
  %176 = vmatpush2.msra.mxu0 0.0
  %177 = vmatprep.subr.mxu0 0.0
  %178 = vmatpush2.msra.mxu0 0.0
  %179 = vmatprep.subr.mxu0 0.0
  %180 = vmatpush2.msra.mxu0 0.0
  %181 = vmatprep.subr.mxu0 0.0
  %182 = vmatpush2.msra.mxu0 0.0
  %183 = vmatprep.subr.mxu0 0.0
  %184 = vmatpush2.msra.mxu0 0.0
  %185 = vmatprep.subr.mxu0 0.0
  %186 = vmatpush2.msra.mxu0 0.0
  %187 = vmatprep.subr.mxu0 0.0
  %188 = vmatpush2.msra.mxu0 0.0
  %189 = vmatprep.subr.mxu0 0.0
  %190 = vmatpush2.msra.mxu0 0.0
  %191 = vmatprep.subr.mxu0 0.0
  %192 = vmatpush2.msra.mxu0 0.0
  %193 = vmatprep.subr.mxu0 0.0
  %194 = vmatpush2.msra.mxu0 0.0
  %195 = vmatprep.subr.mxu0 0.0
  %196 = vmatpush2.msra.mxu0 0.0
  %197 = vmatprep.subr.mxu0 0.0
  %198 = vmatpush2.msra.mxu0 0.0
  %199 = vmatprep.subr.mxu0 0.0
  %200 = vmatpush2.msra.mxu0 0.0
  %201 = vmatprep.subr.mxu0 0.0
  %202 = vmatpush2.msra.mxu0 0.0
  %203 = vmatprep.subr.mxu0 0.0
  %204 = vmatpush2.msra.mxu0 0.0
  %205 = vmatprep.mubr.f32.mxu0 0.0
  %206 = vmatmul.mubr.f32.gmra.mxu0 %v139
  %v207 = vpop.f32.mrf.mxu0
  %v208 = vadd.f32 0.0, %v207
  %v209 = vpop.f32.mrf.mxu0
  %v210 = vadd.f32 0.0, %v209
  %211 = vdwg.mxu0
  %v212 = vmul.f32 %v32, %v208
  %v213 = vmul.f32 %v33, %v210
  %v214 = vmul.f32 %v34, %v208
  %v215 = vmul.f32 %v35, %v210
  %v216 = vmul.f32 %v36, %v208
  %v217 = vmul.f32 %v37, %v210
  %v218 = vmul.f32 %v38, %v208
  %v219 = vmul.f32 %v39, %v210
  %v220 = vmul.f32 %v40, %v208
  %v221 = vmul.f32 %v41, %v210
  %v222 = vmul.f32 %v42, %v208
  %v223 = vmul.f32 %v43, %v210
  %v224 = vmul.f32 %v44, %v208
  %v225 = vmul.f32 %v45, %v210
  %v226 = vmul.f32 %v46, %v208
  %v227 = vmul.f32 %v47, %v210
  %v228 = vrot.slane %v212, 4
  %v229 = vadd.f32 %v212, %v228
  %v230 = vrot.slane %v229, 2
  %v231 = vadd.f32 %v229, %v230
  %v232 = vrot.slane %v231, 1
  %v233 = vadd.f32 %v231, %v232
  %vm234 = vcmask 261120
  %v235 = vsel %vm234, %v213, 0.0
  %v236 = vrot.slane %v235, 4
  %v237 = vadd.f32 %v235, %v236
  %v238 = vrot.slane %v237, 2
  %v239 = vadd.f32 %v237, %v238
  %v240 = vrot.slane %v239, 1
  %v241 = vadd.f32 %v239, %v240
  %v242 = vrot.slane %v214, 4
  %v243 = vadd.f32 %v214, %v242
  %v244 = vrot.slane %v243, 2
  %v245 = vadd.f32 %v243, %v244
  %v246 = vrot.slane %v245, 1
  %v247 = vadd.f32 %v245, %v246
  %v248 = vsel %vm234, %v215, 0.0
  %v249 = vrot.slane %v248, 4
  %v250 = vadd.f32 %v248, %v249
  %v251 = vrot.slane %v250, 2
  %v252 = vadd.f32 %v250, %v251
  %v253 = vrot.slane %v252, 1
  %v254 = vadd.f32 %v252, %v253
  %v255 = vrot.slane %v216, 4
  %v256 = vadd.f32 %v216, %v255
  %v257 = vrot.slane %v256, 2
  %v258 = vadd.f32 %v256, %v257
  %v259 = vrot.slane %v258, 1
  %v260 = vadd.f32 %v258, %v259
  %v261 = vsel %vm234, %v217, 0.0
  %v262 = vrot.slane %v261, 4
  %v263 = vadd.f32 %v261, %v262
  %v264 = vrot.slane %v263, 2
  %v265 = vadd.f32 %v263, %v264
  %v266 = vrot.slane %v265, 1
  %v267 = vadd.f32 %v265, %v266
  %v268 = vrot.slane %v218, 4
  %v269 = vadd.f32 %v218, %v268
  %v270 = vrot.slane %v269, 2
  %v271 = vadd.f32 %v269, %v270
  %v272 = vrot.slane %v271, 1
  %v273 = vadd.f32 %v271, %v272
  %v274 = vsel %vm234, %v219, 0.0
  %v275 = vrot.slane %v274, 4
  %v276 = vadd.f32 %v274, %v275
  %v277 = vrot.slane %v276, 2
  %v278 = vadd.f32 %v276, %v277
  %v279 = vrot.slane %v278, 1
  %v280 = vadd.f32 %v278, %v279
  %v281 = vrot.slane %v220, 4
  %v282 = vadd.f32 %v220, %v281
  %v283 = vrot.slane %v282, 2
  %v284 = vadd.f32 %v282, %v283
  %v285 = vrot.slane %v284, 1
  %v286 = vadd.f32 %v284, %v285
  %v287 = vsel %vm234, %v221, 0.0
  %v288 = vrot.slane %v287, 4
  %v289 = vadd.f32 %v287, %v288
  %v290 = vrot.slane %v289, 2
  %v291 = vadd.f32 %v289, %v290
  %v292 = vrot.slane %v291, 1
  %v293 = vadd.f32 %v291, %v292
  %v294 = vrot.slane %v222, 4
  %v295 = vadd.f32 %v222, %v294
  %v296 = vrot.slane %v295, 2
  %v297 = vadd.f32 %v295, %v296
  %v298 = vrot.slane %v297, 1
  %v299 = vadd.f32 %v297, %v298
  %v300 = vsel %vm234, %v223, 0.0
  %v301 = vrot.slane %v300, 4
  %v302 = vadd.f32 %v300, %v301
  %v303 = vrot.slane %v302, 2
  %v304 = vadd.f32 %v302, %v303
  %v305 = vrot.slane %v304, 1
  %v306 = vadd.f32 %v304, %v305
  %v307 = vrot.slane %v224, 4
  %v308 = vadd.f32 %v224, %v307
  %v309 = vrot.slane %v308, 2
  %v310 = vadd.f32 %v308, %v309
  %v311 = vrot.slane %v310, 1
  %v312 = vadd.f32 %v310, %v311
  %v313 = vsel %vm234, %v225, 0.0
  %v314 = vrot.slane %v313, 4
  %v315 = vadd.f32 %v313, %v314
  %v316 = vrot.slane %v315, 2
  %v317 = vadd.f32 %v315, %v316
  %v318 = vrot.slane %v317, 1
  %v319 = vadd.f32 %v317, %v318
  %v320 = vrot.slane %v226, 4
  %v321 = vadd.f32 %v226, %v320
  %v322 = vrot.slane %v321, 2
  %v323 = vadd.f32 %v321, %v322
  %v324 = vrot.slane %v323, 1
  %v325 = vadd.f32 %v323, %v324
  %v326 = vsel %vm234, %v227, 0.0
  %v327 = vrot.slane %v326, 4
  %v328 = vadd.f32 %v326, %v327
  %v329 = vrot.slane %v328, 2
  %v330 = vadd.f32 %v328, %v329
  %v331 = vrot.slane %v330, 1
  %v332 = vadd.f32 %v330, %v331
  %v333 = vld [vmem:[%s2] sm:$0xff]
  %v334 = vld [vmem:[%s2 + $0x8] sm:$0xff]
  %v335 = vld [vmem:[%s2 + $0x10] sm:$0xff]
  %v336 = vld [vmem:[%s2 + $0x18] sm:$0xff]
  %v337 = vld [vmem:[%s2 + $0x20] sm:$0xff]
  %v338 = vld [vmem:[%s2 + $0x28] sm:$0xff]
  %v339 = vld [vmem:[%s2 + $0x30] sm:$0xff]
  %v340 = vld [vmem:[%s2 + $0x38] sm:$0xff]
  %v341 = vld [vmem:[%s2 + $0x40] sm:$0xff]
  %v342 = vld [vmem:[%s2 + $0x48] sm:$0xff]
  %v343 = vld [vmem:[%s2 + $0x50] sm:$0xff]
  %v344 = vld [vmem:[%s2 + $0x58] sm:$0xff]
  %v345 = vld [vmem:[%s2 + $0x60] sm:$0xff]
  %v346 = vld [vmem:[%s2 + $0x68] sm:$0xff]
  %v347 = vld [vmem:[%s2 + $0x70] sm:$0xff]
  %v348 = vld [vmem:[%s2 + $0x78] sm:$0xff]
  %v349 = vld [vmem:[%s2 + $0x80] sm:$0xff]
  %v350 = vld [vmem:[%s2 + $0x88] sm:$0xff]
  %v351 = vld [vmem:[%s2 + $0x90] sm:$0xff]
  %v352 = vld [vmem:[%s2 + $0x98] sm:$0xff]
  %v353 = vld [vmem:[%s3] sm:$0x1]
  %v355 = vlaneseq
  %v356 = vshrl.u32 %v355, 7
  %v357 = vsub.s32 0, %v356
  %v358 = vrot.slane %v353, %v357
  %vm376 = vcmask 1041409
  %v377 = vsel %vm376, %v247, %v233
  %vm378 = vcmask 1042434
  %v379 = vsel %vm378, %v260, %v377
  %vm380 = vcmask 1043459
  %v381 = vsel %vm380, %v273, %v379
  %vm382 = vcmask 1044484
  %v383 = vsel %vm382, %v286, %v381
  %vm384 = vcmask 1045509
  %v385 = vsel %vm384, %v299, %v383
  %vm386 = vcmask 1046534
  %v387 = vsel %vm386, %v312, %v385
  %vm388 = vcmask 1047559
  %v389 = vsel %vm388, %v325, %v387
  %v390 = vsel %vm376, %v254, %v241
  %v391 = vsel %vm378, %v267, %v390
  %v392 = vsel %vm380, %v280, %v391
  %v393 = vsel %vm382, %v293, %v392
  %v394 = vsel %vm384, %v306, %v393
  %v395 = vsel %vm386, %v319, %v394
  %v396 = vsel %vm388, %v332, %v395
  %v398 = vsel %vm234, %v396, 0
  %400 = vmatprep.subr.mxu0 0.0
  %401 = vmatpush1.msra.mxu0 %v348
  %402 = vmatprep.subr.mxu0 0.0
  %403 = vmatpush1.msra.mxu0 %v347
  %404 = vmatprep.subr.mxu0 0.0
  %405 = vmatpush1.msra.mxu0 %v346
  %406 = vmatprep.subr.mxu0 0.0
  %407 = vmatpush1.msra.mxu0 %v345
  %408 = vmatprep.subr.mxu0 0.0
  %409 = vmatpush1.msra.mxu0 %v344
  %410 = vmatprep.subr.mxu0 0.0
  %411 = vmatpush1.msra.mxu0 %v343
  %412 = vmatprep.subr.mxu0 0.0
  %413 = vmatpush1.msra.mxu0 %v342
  %414 = vmatprep.subr.mxu0 0.0
  %415 = vmatpush1.msra.mxu0 %v341
  %416 = vmatprep.subr.mxu0 0.0
  %417 = vmatpush1.msra.mxu0 %v340
  %418 = vmatprep.subr.mxu0 0.0
  %419 = vmatpush1.msra.mxu0 %v339
  %420 = vmatprep.subr.mxu0 0.0
  %421 = vmatpush1.msra.mxu0 %v338
  %422 = vmatprep.subr.mxu0 0.0
  %423 = vmatpush1.msra.mxu0 %v337
  %424 = vmatprep.subr.mxu0 0.0
  %425 = vmatpush1.msra.mxu0 %v336
  %426 = vmatprep.subr.mxu0 0.0
  %427 = vmatpush1.msra.mxu0 %v335
  %428 = vmatprep.subr.mxu0 0.0
  %429 = vmatpush1.msra.mxu0 %v334
  %430 = vmatprep.subr.mxu0 0.0
  %431 = vmatpush1.msra.mxu0 %v333
  %432 = vmatprep.subr.mxu0 0.0
  %433 = vmatpush2.msra.mxu0 0.0
  %434 = vmatprep.subr.mxu0 0.0
  %435 = vmatpush2.msra.mxu0 0.0
  %436 = vmatprep.subr.mxu0 0.0
  %437 = vmatpush2.msra.mxu0 0.0
  %438 = vmatprep.subr.mxu0 0.0
  %439 = vmatpush2.msra.mxu0 0.0
  %440 = vmatprep.subr.mxu0 0.0
  %441 = vmatpush2.msra.mxu0 0.0
  %442 = vmatprep.subr.mxu0 0.0
  %443 = vmatpush2.msra.mxu0 0.0
  %444 = vmatprep.subr.mxu0 0.0
  %445 = vmatpush2.msra.mxu0 0.0
  %446 = vmatprep.subr.mxu0 0.0
  %447 = vmatpush2.msra.mxu0 0.0
  %448 = vmatprep.subr.mxu0 0.0
  %449 = vmatpush2.msra.mxu0 0.0
  %450 = vmatprep.subr.mxu0 0.0
  %451 = vmatpush2.msra.mxu0 0.0
  %452 = vmatprep.subr.mxu0 0.0
  %453 = vmatpush2.msra.mxu0 0.0
  %454 = vmatprep.subr.mxu0 0.0
  %455 = vmatpush2.msra.mxu0 0.0
  %456 = vmatprep.subr.mxu0 0.0
  %457 = vmatpush2.msra.mxu0 %v352
  %458 = vmatprep.subr.mxu0 0.0
  %459 = vmatpush2.msra.mxu0 %v351
  %460 = vmatprep.subr.mxu0 0.0
  %461 = vmatpush2.msra.mxu0 %v350
  %462 = vmatprep.subr.mxu0 0.0
  %463 = vmatpush2.msra.mxu0 %v349
  %464 = vmatprep.mubr.f32.mxu0 %v398
  %465 = vmatmul.mubr.f32.gmra.mxu0 %v389
  %v466 = vpop.f32.mrf.mxu0
  %v467 = vadd.f32 %v358, %v466
  %v468 = vpop.f32.mrf.mxu0
  %469 = vdwg.mxu0
  %vm470 = vcmp.gt.f32.partialorder %v467, 0.0
  %v471 = vmin.f32 %v467, 0.0
  %v472 = vmul.f32 %v471, 1.442695
  %v473 = vpow.pop %v472
  %v474 = vsub.f32 %v473, 1.0
  %v475 = vsel %vm470, %v467, %v474
  %v476 = vld [vmem:[%s4] sm:$0xff]
  %v477 = vld [vmem:[%s4 + $0x8] sm:$0xff]
  %v478 = vld [vmem:[%s4 + $0x10] sm:$0xff]
  %v479 = vld [vmem:[%s4 + $0x18] sm:$0xff]
  %v480 = vld [vmem:[%s4 + $0x20] sm:$0xff]
  %v481 = vld [vmem:[%s4 + $0x28] sm:$0xff]
  %v482 = vld [vmem:[%s4 + $0x30] sm:$0xff]
  %v483 = vld [vmem:[%s4 + $0x38] sm:$0xff]
  %v484 = vld [vmem:[%s4 + $0x40] sm:$0xff]
  %v485 = vld [vmem:[%s4 + $0x48] sm:$0xff]
  %v486 = vld [vmem:[%s4 + $0x50] sm:$0xff]
  %v487 = vld [vmem:[%s4 + $0x58] sm:$0xff]
  %v488 = vld [vmem:[%s4 + $0x60] sm:$0xff]
  %v489 = vld [vmem:[%s4 + $0x68] sm:$0xff]
  %v490 = vld [vmem:[%s4 + $0x70] sm:$0xff]
  %v491 = vld [vmem:[%s4 + $0x78] sm:$0xff]
  %v492 = vld [vmem:[%s4 + $0x80] sm:$0xff]
  %v493 = vld [vmem:[%s4 + $0x88] sm:$0xff]
  %vm494 = vcmask 588800
  %v496 = vsel %vm494, %v475, 0
  %498 = vmatprep.subr.mxu0 0.0
  %499 = vmatpush1.msra.mxu0 0.0
  %500 = vmatprep.subr.mxu0 0.0
  %501 = vmatpush1.msra.mxu0 0.0
  %502 = vmatprep.subr.mxu0 0.0
  %503 = vmatpush1.msra.mxu0 0.0
  %504 = vmatprep.subr.mxu0 0.0
  %505 = vmatpush1.msra.mxu0 0.0
  %506 = vmatprep.subr.mxu0 0.0
  %507 = vmatpush1.msra.mxu0 0.0
  %508 = vmatprep.subr.mxu0 0.0
  %509 = vmatpush1.msra.mxu0 0.0
  %510 = vmatprep.subr.mxu0 0.0
  %511 = vmatpush1.msra.mxu0 0.0
  %512 = vmatprep.subr.mxu0 %v493
  %513 = vmatpush1.msra.mxu0 %v492
  %514 = vmatprep.subr.mxu0 %v491
  %515 = vmatpush1.msra.mxu0 %v490
  %516 = vmatprep.subr.mxu0 %v489
  %517 = vmatpush1.msra.mxu0 %v488
  %518 = vmatprep.subr.mxu0 %v487
  %519 = vmatpush1.msra.mxu0 %v486
  %520 = vmatprep.subr.mxu0 %v485
  %521 = vmatpush1.msra.mxu0 %v484
  %522 = vmatprep.subr.mxu0 %v483
  %523 = vmatpush1.msra.mxu0 %v482
  %524 = vmatprep.subr.mxu0 %v481
  %525 = vmatpush1.msra.mxu0 %v480
  %526 = vmatprep.subr.mxu0 %v479
  %527 = vmatpush1.msra.mxu0 %v478
  %528 = vmatprep.subr.mxu0 %v477
  %529 = vmatpush1.msra.mxu0 %v476
  %530 = vmatprep.subr.mxu0 0.0
  %531 = vmatpush2.msra.mxu0 0.0
  %532 = vmatprep.subr.mxu0 0.0
  %533 = vmatpush2.msra.mxu0 0.0
  %534 = vmatprep.subr.mxu0 0.0
  %535 = vmatpush2.msra.mxu0 0.0
  %536 = vmatprep.subr.mxu0 0.0
  %537 = vmatpush2.msra.mxu0 0.0
  %538 = vmatprep.subr.mxu0 0.0
  %539 = vmatpush2.msra.mxu0 0.0
  %540 = vmatprep.subr.mxu0 0.0
  %541 = vmatpush2.msra.mxu0 0.0
  %542 = vmatprep.subr.mxu0 0.0
  %543 = vmatpush2.msra.mxu0 0.0
  %544 = vmatprep.subr.mxu0 0.0
  %545 = vmatpush2.msra.mxu0 0.0
  %546 = vmatprep.subr.mxu0 0.0
  %547 = vmatpush2.msra.mxu0 0.0
  %548 = vmatprep.subr.mxu0 0.0
  %549 = vmatpush2.msra.mxu0 0.0
  %550 = vmatprep.subr.mxu0 0.0
  %551 = vmatpush2.msra.mxu0 0.0
  %552 = vmatprep.subr.mxu0 0.0
  %553 = vmatpush2.msra.mxu0 0.0
  %554 = vmatprep.subr.mxu0 0.0
  %555 = vmatpush2.msra.mxu0 0.0
  %556 = vmatprep.subr.mxu0 0.0
  %557 = vmatpush2.msra.mxu0 0.0
  %558 = vmatprep.subr.mxu0 0.0
  %559 = vmatpush2.msra.mxu0 0.0
  %560 = vmatprep.subr.mxu0 0.0
  %561 = vmatpush2.msra.mxu0 0.0
  %562 = vmatprep.mubr.f32.mxu0 0.0
  %563 = vmatmul.mubr.f32.gmra.mxu0 %v496
  %v564 = vpop.f32.mrf.mxu0
  %v565 = vadd.f32 0.0, %v564
  %v566 = vpop.f32.mrf.mxu0
  %v567 = vadd.f32 0.0, %v566
  %568 = vdwg.mxu0
  %v569 = vmul.f32 %v32, %v565
  %v570 = vmul.f32 %v33, %v567
  %v571 = vmul.f32 %v34, %v565
  %v572 = vmul.f32 %v35, %v567
  %v573 = vmul.f32 %v36, %v565
  %v574 = vmul.f32 %v37, %v567
  %v575 = vmul.f32 %v38, %v565
  %v576 = vmul.f32 %v39, %v567
  %v577 = vmul.f32 %v40, %v565
  %v578 = vmul.f32 %v41, %v567
  %v579 = vmul.f32 %v42, %v565
  %v580 = vmul.f32 %v43, %v567
  %v581 = vmul.f32 %v44, %v565
  %v582 = vmul.f32 %v45, %v567
  %v583 = vmul.f32 %v46, %v565
  %v584 = vmul.f32 %v47, %v567
  %v585 = vrot.slane %v569, 4
  %v586 = vadd.f32 %v569, %v585
  %v587 = vrot.slane %v586, 2
  %v588 = vadd.f32 %v586, %v587
  %v589 = vrot.slane %v588, 1
  %v590 = vadd.f32 %v588, %v589
  %v591 = vsel %vm234, %v570, 0.0
  %v592 = vrot.slane %v591, 4
  %v593 = vadd.f32 %v591, %v592
  %v594 = vrot.slane %v593, 2
  %v595 = vadd.f32 %v593, %v594
  %v596 = vrot.slane %v595, 1
  %v597 = vadd.f32 %v595, %v596
  %v598 = vrot.slane %v571, 4
  %v599 = vadd.f32 %v571, %v598
  %v600 = vrot.slane %v599, 2
  %v601 = vadd.f32 %v599, %v600
  %v602 = vrot.slane %v601, 1
  %v603 = vadd.f32 %v601, %v602
  %v604 = vsel %vm234, %v572, 0.0
  %v605 = vrot.slane %v604, 4
  %v606 = vadd.f32 %v604, %v605
  %v607 = vrot.slane %v606, 2
  %v608 = vadd.f32 %v606, %v607
  %v609 = vrot.slane %v608, 1
  %v610 = vadd.f32 %v608, %v609
  %v611 = vrot.slane %v573, 4
  %v612 = vadd.f32 %v573, %v611
  %v613 = vrot.slane %v612, 2
  %v614 = vadd.f32 %v612, %v613
  %v615 = vrot.slane %v614, 1
  %v616 = vadd.f32 %v614, %v615
  %v617 = vsel %vm234, %v574, 0.0
  %v618 = vrot.slane %v617, 4
  %v619 = vadd.f32 %v617, %v618
  %v620 = vrot.slane %v619, 2
  %v621 = vadd.f32 %v619, %v620
  %v622 = vrot.slane %v621, 1
  %v623 = vadd.f32 %v621, %v622
  %v624 = vrot.slane %v575, 4
  %v625 = vadd.f32 %v575, %v624
  %v626 = vrot.slane %v625, 2
  %v627 = vadd.f32 %v625, %v626
  %v628 = vrot.slane %v627, 1
  %v629 = vadd.f32 %v627, %v628
  %v630 = vsel %vm234, %v576, 0.0
  %v631 = vrot.slane %v630, 4
  %v632 = vadd.f32 %v630, %v631
  %v633 = vrot.slane %v632, 2
  %v634 = vadd.f32 %v632, %v633
  %v635 = vrot.slane %v634, 1
  %v636 = vadd.f32 %v634, %v635
  %v637 = vrot.slane %v577, 4
  %v638 = vadd.f32 %v577, %v637
  %v639 = vrot.slane %v638, 2
  %v640 = vadd.f32 %v638, %v639
  %v641 = vrot.slane %v640, 1
  %v642 = vadd.f32 %v640, %v641
  %v643 = vsel %vm234, %v578, 0.0
  %v644 = vrot.slane %v643, 4
  %v645 = vadd.f32 %v643, %v644
  %v646 = vrot.slane %v645, 2
  %v647 = vadd.f32 %v645, %v646
  %v648 = vrot.slane %v647, 1
  %v649 = vadd.f32 %v647, %v648
  %v650 = vrot.slane %v579, 4
  %v651 = vadd.f32 %v579, %v650
  %v652 = vrot.slane %v651, 2
  %v653 = vadd.f32 %v651, %v652
  %v654 = vrot.slane %v653, 1
  %v655 = vadd.f32 %v653, %v654
  %v656 = vsel %vm234, %v580, 0.0
  %v657 = vrot.slane %v656, 4
  %v658 = vadd.f32 %v656, %v657
  %v659 = vrot.slane %v658, 2
  %v660 = vadd.f32 %v658, %v659
  %v661 = vrot.slane %v660, 1
  %v662 = vadd.f32 %v660, %v661
  %v663 = vrot.slane %v581, 4
  %v664 = vadd.f32 %v581, %v663
  %v665 = vrot.slane %v664, 2
  %v666 = vadd.f32 %v664, %v665
  %v667 = vrot.slane %v666, 1
  %v668 = vadd.f32 %v666, %v667
  %v669 = vsel %vm234, %v582, 0.0
  %v670 = vrot.slane %v669, 4
  %v671 = vadd.f32 %v669, %v670
  %v672 = vrot.slane %v671, 2
  %v673 = vadd.f32 %v671, %v672
  %v674 = vrot.slane %v673, 1
  %v675 = vadd.f32 %v673, %v674
  %v676 = vrot.slane %v583, 4
  %v677 = vadd.f32 %v583, %v676
  %v678 = vrot.slane %v677, 2
  %v679 = vadd.f32 %v677, %v678
  %v680 = vrot.slane %v679, 1
  %v681 = vadd.f32 %v679, %v680
  %v682 = vsel %vm234, %v584, 0.0
  %v683 = vrot.slane %v682, 4
  %v684 = vadd.f32 %v682, %v683
  %v685 = vrot.slane %v684, 2
  %v686 = vadd.f32 %v684, %v685
  %v687 = vrot.slane %v686, 1
  %v688 = vadd.f32 %v686, %v687
  %v689 = vld [vmem:[%s5] sm:$0xff]
  %v690 = vld [vmem:[%s5 + $0x8] sm:$0xff]
  %v691 = vld [vmem:[%s5 + $0x10] sm:$0xff]
  %v692 = vld [vmem:[%s5 + $0x18] sm:$0xff]
  %v693 = vld [vmem:[%s5 + $0x20] sm:$0xff]
  %v694 = vld [vmem:[%s5 + $0x28] sm:$0xff]
  %v695 = vld [vmem:[%s5 + $0x30] sm:$0xff]
  %v696 = vld [vmem:[%s5 + $0x38] sm:$0xff]
  %v697 = vld [vmem:[%s5 + $0x40] sm:$0xff]
  %v698 = vld [vmem:[%s5 + $0x48] sm:$0xff]
  %v699 = vld [vmem:[%s5 + $0x50] sm:$0xff]
  %v700 = vld [vmem:[%s5 + $0x58] sm:$0xff]
  %v701 = vld [vmem:[%s5 + $0x60] sm:$0xff]
  %v702 = vld [vmem:[%s5 + $0x68] sm:$0xff]
  %v703 = vld [vmem:[%s5 + $0x70] sm:$0xff]
  %v704 = vld [vmem:[%s5 + $0x78] sm:$0xff]
  %v705 = vld [vmem:[%s5 + $0x80] sm:$0xff]
  %v706 = vld [vmem:[%s5 + $0x88] sm:$0xff]
  %v707 = vld [vmem:[%s5 + $0x90] sm:$0xff]
  %v708 = vld [vmem:[%s5 + $0x98] sm:$0xff]
  %s709 = scalar_lea.vmem %s4, 144
  %v710 = vld [vmem:[%s709] sm:$0xff]
  %v711 = vld [vmem:[%s709 + $0x8] sm:$0xff]
  %v712 = vld [vmem:[%s709 + $0x10] sm:$0xff]
  %v713 = vld [vmem:[%s709 + $0x18] sm:$0xff]
  %v714 = vld [vmem:[%s709 + $0x20] sm:$0xff]
  %v715 = vld [vmem:[%s709 + $0x28] sm:$0xff]
  %v716 = vld [vmem:[%s709 + $0x30] sm:$0xff]
  %v717 = vld [vmem:[%s709 + $0x38] sm:$0xff]
  %v718 = vld [vmem:[%s709 + $0x40] sm:$0xff]
  %v719 = vld [vmem:[%s709 + $0x48] sm:$0xff]
  %v720 = vld [vmem:[%s709 + $0x50] sm:$0xff]
  %v721 = vld [vmem:[%s709 + $0x58] sm:$0xff]
  %v722 = vld [vmem:[%s709 + $0x60] sm:$0xff]
  %v723 = vld [vmem:[%s709 + $0x68] sm:$0xff]
  %v724 = vld [vmem:[%s709 + $0x70] sm:$0xff]
  %v725 = vld [vmem:[%s709 + $0x78] sm:$0xff]
  %v726 = vld [vmem:[%s709 + $0x80] sm:$0xff]
  %v727 = vld [vmem:[%s709 + $0x88] sm:$0xff]
  %728 = vmatprep.subr.mxu0 0.0
  %729 = vmatpush1.msra.mxu0 0.0
  %730 = vmatprep.subr.mxu0 0.0
  %731 = vmatpush1.msra.mxu0 0.0
  %732 = vmatprep.subr.mxu0 0.0
  %733 = vmatpush1.msra.mxu0 0.0
  %734 = vmatprep.subr.mxu0 0.0
  %735 = vmatpush1.msra.mxu0 0.0
  %736 = vmatprep.subr.mxu0 0.0
  %737 = vmatpush1.msra.mxu0 0.0
  %738 = vmatprep.subr.mxu0 0.0
  %739 = vmatpush1.msra.mxu0 0.0
  %740 = vmatprep.subr.mxu0 0.0
  %741 = vmatpush1.msra.mxu0 0.0
  %742 = vmatprep.subr.mxu0 %v727
  %743 = vmatpush1.msra.mxu0 %v726
  %744 = vmatprep.subr.mxu0 %v725
  %745 = vmatpush1.msra.mxu0 %v724
  %746 = vmatprep.subr.mxu0 %v723
  %747 = vmatpush1.msra.mxu0 %v722
  %748 = vmatprep.subr.mxu0 %v721
  %749 = vmatpush1.msra.mxu0 %v720
  %750 = vmatprep.subr.mxu0 %v719
  %751 = vmatpush1.msra.mxu0 %v718
  %752 = vmatprep.subr.mxu0 %v717
  %753 = vmatpush1.msra.mxu0 %v716
  %754 = vmatprep.subr.mxu0 %v715
  %755 = vmatpush1.msra.mxu0 %v714
  %756 = vmatprep.subr.mxu0 %v713
  %757 = vmatpush1.msra.mxu0 %v712
  %758 = vmatprep.subr.mxu0 %v711
  %759 = vmatpush1.msra.mxu0 %v710
  %760 = vmatprep.subr.mxu0 0.0
  %761 = vmatpush2.msra.mxu0 0.0
  %762 = vmatprep.subr.mxu0 0.0
  %763 = vmatpush2.msra.mxu0 0.0
  %764 = vmatprep.subr.mxu0 0.0
  %765 = vmatpush2.msra.mxu0 0.0
  %766 = vmatprep.subr.mxu0 0.0
  %767 = vmatpush2.msra.mxu0 0.0
  %768 = vmatprep.subr.mxu0 0.0
  %769 = vmatpush2.msra.mxu0 0.0
  %770 = vmatprep.subr.mxu0 0.0
  %771 = vmatpush2.msra.mxu0 0.0
  %772 = vmatprep.subr.mxu0 0.0
  %773 = vmatpush2.msra.mxu0 0.0
  %774 = vmatprep.subr.mxu0 0.0
  %775 = vmatpush2.msra.mxu0 0.0
  %776 = vmatprep.subr.mxu0 0.0
  %777 = vmatpush2.msra.mxu0 0.0
  %778 = vmatprep.subr.mxu0 0.0
  %779 = vmatpush2.msra.mxu0 0.0
  %780 = vmatprep.subr.mxu0 0.0
  %781 = vmatpush2.msra.mxu0 0.0
  %782 = vmatprep.subr.mxu0 0.0
  %783 = vmatpush2.msra.mxu0 0.0
  %784 = vmatprep.subr.mxu0 0.0
  %785 = vmatpush2.msra.mxu0 0.0
  %786 = vmatprep.subr.mxu0 0.0
  %787 = vmatpush2.msra.mxu0 0.0
  %788 = vmatprep.subr.mxu0 0.0
  %789 = vmatpush2.msra.mxu0 0.0
  %790 = vmatprep.subr.mxu0 0.0
  %791 = vmatpush2.msra.mxu0 0.0
  %792 = vmatprep.mubr.f32.mxu0 0.0
  %793 = vmatmul.mubr.f32.gmra.mxu0 %v496
  %v794 = vpop.f32.mrf.mxu0
  %v795 = vadd.f32 0.0, %v794
  %v796 = vpop.f32.mrf.mxu0
  %v797 = vadd.f32 0.0, %v796
  %798 = vdwg.mxu0
  %v799 = vmul.f32 %v32, %v795
  %v800 = vmul.f32 %v33, %v797
  %v801 = vmul.f32 %v34, %v795
  %v802 = vmul.f32 %v35, %v797
  %v803 = vmul.f32 %v36, %v795
  %v804 = vmul.f32 %v37, %v797
  %v805 = vmul.f32 %v38, %v795
  %v806 = vmul.f32 %v39, %v797
  %v807 = vmul.f32 %v40, %v795
  %v808 = vmul.f32 %v41, %v797
  %v809 = vmul.f32 %v42, %v795
  %v810 = vmul.f32 %v43, %v797
  %v811 = vmul.f32 %v44, %v795
  %v812 = vmul.f32 %v45, %v797
  %v813 = vmul.f32 %v46, %v795
  %v814 = vmul.f32 %v47, %v797
  %v815 = vrot.slane %v799, 4
  %v816 = vadd.f32 %v799, %v815
  %v817 = vrot.slane %v816, 2
  %v818 = vadd.f32 %v816, %v817
  %v819 = vrot.slane %v818, 1
  %v820 = vadd.f32 %v818, %v819
  %v821 = vsel %vm234, %v800, 0.0
  %v822 = vrot.slane %v821, 4
  %v823 = vadd.f32 %v821, %v822
  %v824 = vrot.slane %v823, 2
  %v825 = vadd.f32 %v823, %v824
  %v826 = vrot.slane %v825, 1
  %v827 = vadd.f32 %v825, %v826
  %v828 = vrot.slane %v801, 4
  %v829 = vadd.f32 %v801, %v828
  %v830 = vrot.slane %v829, 2
  %v831 = vadd.f32 %v829, %v830
  %v832 = vrot.slane %v831, 1
  %v833 = vadd.f32 %v831, %v832
  %v834 = vsel %vm234, %v802, 0.0
  %v835 = vrot.slane %v834, 4
  %v836 = vadd.f32 %v834, %v835
  %v837 = vrot.slane %v836, 2
  %v838 = vadd.f32 %v836, %v837
  %v839 = vrot.slane %v838, 1
  %v840 = vadd.f32 %v838, %v839
  %v841 = vrot.slane %v803, 4
  %v842 = vadd.f32 %v803, %v841
  %v843 = vrot.slane %v842, 2
  %v844 = vadd.f32 %v842, %v843
  %v845 = vrot.slane %v844, 1
  %v846 = vadd.f32 %v844, %v845
  %v847 = vsel %vm234, %v804, 0.0
  %v848 = vrot.slane %v847, 4
  %v849 = vadd.f32 %v847, %v848
  %v850 = vrot.slane %v849, 2
  %v851 = vadd.f32 %v849, %v850
  %v852 = vrot.slane %v851, 1
  %v853 = vadd.f32 %v851, %v852
  %v854 = vrot.slane %v805, 4
  %v855 = vadd.f32 %v805, %v854
  %v856 = vrot.slane %v855, 2
  %v857 = vadd.f32 %v855, %v856
  %v858 = vrot.slane %v857, 1
  %v859 = vadd.f32 %v857, %v858
  %v860 = vsel %vm234, %v806, 0.0
  %v861 = vrot.slane %v860, 4
  %v862 = vadd.f32 %v860, %v861
  %v863 = vrot.slane %v862, 2
  %v864 = vadd.f32 %v862, %v863
  %v865 = vrot.slane %v864, 1
  %v866 = vadd.f32 %v864, %v865
  %v867 = vrot.slane %v807, 4
  %v868 = vadd.f32 %v807, %v867
  %v869 = vrot.slane %v868, 2
  %v870 = vadd.f32 %v868, %v869
  %v871 = vrot.slane %v870, 1
  %v872 = vadd.f32 %v870, %v871
  %v873 = vsel %vm234, %v808, 0.0
  %v874 = vrot.slane %v873, 4
  %v875 = vadd.f32 %v873, %v874
  %v876 = vrot.slane %v875, 2
  %v877 = vadd.f32 %v875, %v876
  %v878 = vrot.slane %v877, 1
  %v879 = vadd.f32 %v877, %v878
  %v880 = vrot.slane %v809, 4
  %v881 = vadd.f32 %v809, %v880
  %v882 = vrot.slane %v881, 2
  %v883 = vadd.f32 %v881, %v882
  %v884 = vrot.slane %v883, 1
  %v885 = vadd.f32 %v883, %v884
  %v886 = vsel %vm234, %v810, 0.0
  %v887 = vrot.slane %v886, 4
  %v888 = vadd.f32 %v886, %v887
  %v889 = vrot.slane %v888, 2
  %v890 = vadd.f32 %v888, %v889
  %v891 = vrot.slane %v890, 1
  %v892 = vadd.f32 %v890, %v891
  %v893 = vrot.slane %v811, 4
  %v894 = vadd.f32 %v811, %v893
  %v895 = vrot.slane %v894, 2
  %v896 = vadd.f32 %v894, %v895
  %v897 = vrot.slane %v896, 1
  %v898 = vadd.f32 %v896, %v897
  %v899 = vsel %vm234, %v812, 0.0
  %v900 = vrot.slane %v899, 4
  %v901 = vadd.f32 %v899, %v900
  %v902 = vrot.slane %v901, 2
  %v903 = vadd.f32 %v901, %v902
  %v904 = vrot.slane %v903, 1
  %v905 = vadd.f32 %v903, %v904
  %v906 = vrot.slane %v813, 4
  %v907 = vadd.f32 %v813, %v906
  %v908 = vrot.slane %v907, 2
  %v909 = vadd.f32 %v907, %v908
  %v910 = vrot.slane %v909, 1
  %v911 = vadd.f32 %v909, %v910
  %v912 = vsel %vm234, %v814, 0.0
  %v913 = vrot.slane %v912, 4
  %v914 = vadd.f32 %v912, %v913
  %v915 = vrot.slane %v914, 2
  %v916 = vadd.f32 %v914, %v915
  %v917 = vrot.slane %v916, 1
  %v918 = vadd.f32 %v916, %v917
  %s919 = scalar_lea.vmem %s5, 160
  %v920 = vld [vmem:[%s919] sm:$0xff]
  %v921 = vld [vmem:[%s919 + $0x8] sm:$0xff]
  %v922 = vld [vmem:[%s919 + $0x10] sm:$0xff]
  %v923 = vld [vmem:[%s919 + $0x18] sm:$0xff]
  %v924 = vld [vmem:[%s919 + $0x20] sm:$0xff]
  %v925 = vld [vmem:[%s919 + $0x28] sm:$0xff]
  %v926 = vld [vmem:[%s919 + $0x30] sm:$0xff]
  %v927 = vld [vmem:[%s919 + $0x38] sm:$0xff]
  %v928 = vld [vmem:[%s919 + $0x40] sm:$0xff]
  %v929 = vld [vmem:[%s919 + $0x48] sm:$0xff]
  %v930 = vld [vmem:[%s919 + $0x50] sm:$0xff]
  %v931 = vld [vmem:[%s919 + $0x58] sm:$0xff]
  %v932 = vld [vmem:[%s919 + $0x60] sm:$0xff]
  %v933 = vld [vmem:[%s919 + $0x68] sm:$0xff]
  %v934 = vld [vmem:[%s919 + $0x70] sm:$0xff]
  %v935 = vld [vmem:[%s919 + $0x78] sm:$0xff]
  %v936 = vld [vmem:[%s919 + $0x80] sm:$0xff]
  %v937 = vld [vmem:[%s919 + $0x88] sm:$0xff]
  %v938 = vld [vmem:[%s919 + $0x90] sm:$0xff]
  %v939 = vld [vmem:[%s919 + $0x98] sm:$0xff]
  %v956 = vsel %vm376, %v833, %v820
  %v957 = vsel %vm378, %v846, %v956
  %v958 = vsel %vm380, %v859, %v957
  %v959 = vsel %vm382, %v872, %v958
  %v960 = vsel %vm384, %v885, %v959
  %v961 = vsel %vm386, %v898, %v960
  %v962 = vsel %vm388, %v911, %v961
  %v963 = vsel %vm376, %v840, %v827
  %v964 = vsel %vm378, %v853, %v963
  %v965 = vsel %vm380, %v866, %v964
  %v966 = vsel %vm382, %v879, %v965
  %v967 = vsel %vm384, %v892, %v966
  %v968 = vsel %vm386, %v905, %v967
  %v969 = vsel %vm388, %v918, %v968
  %v971 = vsel %vm234, %v969, 0
  %973 = vmatprep.subr.mxu0 0.0
  %974 = vmatpush1.msra.mxu0 %v935
  %975 = vmatprep.subr.mxu0 0.0
  %976 = vmatpush1.msra.mxu0 %v934
  %977 = vmatprep.subr.mxu0 0.0
  %978 = vmatpush1.msra.mxu0 %v933
  %979 = vmatprep.subr.mxu0 0.0
  %980 = vmatpush1.msra.mxu0 %v932
  %981 = vmatprep.subr.mxu0 0.0
  %982 = vmatpush1.msra.mxu0 %v931
  %983 = vmatprep.subr.mxu0 0.0
  %984 = vmatpush1.msra.mxu0 %v930
  %985 = vmatprep.subr.mxu0 0.0
  %986 = vmatpush1.msra.mxu0 %v929
  %987 = vmatprep.subr.mxu0 0.0
  %988 = vmatpush1.msra.mxu0 %v928
  %989 = vmatprep.subr.mxu0 0.0
  %990 = vmatpush1.msra.mxu0 %v927
  %991 = vmatprep.subr.mxu0 0.0
  %992 = vmatpush1.msra.mxu0 %v926
  %993 = vmatprep.subr.mxu0 0.0
  %994 = vmatpush1.msra.mxu0 %v925
  %995 = vmatprep.subr.mxu0 0.0
  %996 = vmatpush1.msra.mxu0 %v924
  %997 = vmatprep.subr.mxu0 0.0
  %998 = vmatpush1.msra.mxu0 %v923
  %999 = vmatprep.subr.mxu0 0.0
  %1000 = vmatpush1.msra.mxu0 %v922
  %1001 = vmatprep.subr.mxu0 0.0
  %1002 = vmatpush1.msra.mxu0 %v921
  %1003 = vmatprep.subr.mxu0 0.0
  %1004 = vmatpush1.msra.mxu0 %v920
  %1005 = vmatprep.subr.mxu0 0.0
  %1006 = vmatpush2.msra.mxu0 0.0
  %1007 = vmatprep.subr.mxu0 0.0
  %1008 = vmatpush2.msra.mxu0 0.0
  %1009 = vmatprep.subr.mxu0 0.0
  %1010 = vmatpush2.msra.mxu0 0.0
  %1011 = vmatprep.subr.mxu0 0.0
  %1012 = vmatpush2.msra.mxu0 0.0
  %1013 = vmatprep.subr.mxu0 0.0
  %1014 = vmatpush2.msra.mxu0 0.0
  %1015 = vmatprep.subr.mxu0 0.0
  %1016 = vmatpush2.msra.mxu0 0.0
  %1017 = vmatprep.subr.mxu0 0.0
  %1018 = vmatpush2.msra.mxu0 0.0
  %1019 = vmatprep.subr.mxu0 0.0
  %1020 = vmatpush2.msra.mxu0 0.0
  %1021 = vmatprep.subr.mxu0 0.0
  %1022 = vmatpush2.msra.mxu0 0.0
  %1023 = vmatprep.subr.mxu0 0.0
  %1024 = vmatpush2.msra.mxu0 0.0
  %1025 = vmatprep.subr.mxu0 0.0
  %1026 = vmatpush2.msra.mxu0 0.0
  %1027 = vmatprep.subr.mxu0 0.0
  %1028 = vmatpush2.msra.mxu0 0.0
  %1029 = vmatprep.subr.mxu0 0.0
  %1030 = vmatpush2.msra.mxu0 %v939
  %1031 = vmatprep.subr.mxu0 0.0
  %1032 = vmatpush2.msra.mxu0 %v938
  %1033 = vmatprep.subr.mxu0 0.0
  %1034 = vmatpush2.msra.mxu0 %v937
  %1035 = vmatprep.subr.mxu0 0.0
  %1036 = vmatpush2.msra.mxu0 %v936
  %1037 = vmatprep.mubr.f32.mxu0 %v971
  %1038 = vmatmul.mubr.f32.gmra.mxu0 %v962
  %v1039 = vpop.f32.mrf.mxu0
  %v1040 = vadd.f32 0.0, %v1039
  %v1041 = vpop.f32.mrf.mxu0
  %1042 = vdwg.mxu0
  %v1059 = vsel %vm376, %v603, %v590
  %v1060 = vsel %vm378, %v616, %v1059
  %v1061 = vsel %vm380, %v629, %v1060
  %v1062 = vsel %vm382, %v642, %v1061
  %v1063 = vsel %vm384, %v655, %v1062
  %v1064 = vsel %vm386, %v668, %v1063
  %v1065 = vsel %vm388, %v681, %v1064
  %v1066 = vsel %vm376, %v610, %v597
  %v1067 = vsel %vm378, %v623, %v1066
  %v1068 = vsel %vm380, %v636, %v1067
  %v1069 = vsel %vm382, %v649, %v1068
  %v1070 = vsel %vm384, %v662, %v1069
  %v1071 = vsel %vm386, %v675, %v1070
  %v1072 = vsel %vm388, %v688, %v1071
  %v1074 = vsel %vm234, %v1072, 0
  %1076 = vmatprep.subr.mxu0 0.0
  %1077 = vmatpush1.msra.mxu0 %v704
  %1078 = vmatprep.subr.mxu0 0.0
  %1079 = vmatpush1.msra.mxu0 %v703
  %1080 = vmatprep.subr.mxu0 0.0
  %1081 = vmatpush1.msra.mxu0 %v702
  %1082 = vmatprep.subr.mxu0 0.0
  %1083 = vmatpush1.msra.mxu0 %v701
  %1084 = vmatprep.subr.mxu0 0.0
  %1085 = vmatpush1.msra.mxu0 %v700
  %1086 = vmatprep.subr.mxu0 0.0
  %1087 = vmatpush1.msra.mxu0 %v699
  %1088 = vmatprep.subr.mxu0 0.0
  %1089 = vmatpush1.msra.mxu0 %v698
  %1090 = vmatprep.subr.mxu0 0.0
  %1091 = vmatpush1.msra.mxu0 %v697
  %1092 = vmatprep.subr.mxu0 0.0
  %1093 = vmatpush1.msra.mxu0 %v696
  %1094 = vmatprep.subr.mxu0 0.0
  %1095 = vmatpush1.msra.mxu0 %v695
  %1096 = vmatprep.subr.mxu0 0.0
  %1097 = vmatpush1.msra.mxu0 %v694
  %1098 = vmatprep.subr.mxu0 0.0
  %1099 = vmatpush1.msra.mxu0 %v693
  %1100 = vmatprep.subr.mxu0 0.0
  %1101 = vmatpush1.msra.mxu0 %v692
  %1102 = vmatprep.subr.mxu0 0.0
  %1103 = vmatpush1.msra.mxu0 %v691
  %1104 = vmatprep.subr.mxu0 0.0
  %1105 = vmatpush1.msra.mxu0 %v690
  %1106 = vmatprep.subr.mxu0 0.0
  %1107 = vmatpush1.msra.mxu0 %v689
  %1108 = vmatprep.subr.mxu0 0.0
  %1109 = vmatpush2.msra.mxu0 0.0
  %1110 = vmatprep.subr.mxu0 0.0
  %1111 = vmatpush2.msra.mxu0 0.0
  %1112 = vmatprep.subr.mxu0 0.0
  %1113 = vmatpush2.msra.mxu0 0.0
  %1114 = vmatprep.subr.mxu0 0.0
  %1115 = vmatpush2.msra.mxu0 0.0
  %1116 = vmatprep.subr.mxu0 0.0
  %1117 = vmatpush2.msra.mxu0 0.0
  %1118 = vmatprep.subr.mxu0 0.0
  %1119 = vmatpush2.msra.mxu0 0.0
  %1120 = vmatprep.subr.mxu0 0.0
  %1121 = vmatpush2.msra.mxu0 0.0
  %1122 = vmatprep.subr.mxu0 0.0
  %1123 = vmatpush2.msra.mxu0 0.0
  %1124 = vmatprep.subr.mxu0 0.0
  %1125 = vmatpush2.msra.mxu0 0.0
  %1126 = vmatprep.subr.mxu0 0.0
  %1127 = vmatpush2.msra.mxu0 0.0
  %1128 = vmatprep.subr.mxu0 0.0
  %1129 = vmatpush2.msra.mxu0 0.0
  %1130 = vmatprep.subr.mxu0 0.0
  %1131 = vmatpush2.msra.mxu0 0.0
  %1132 = vmatprep.subr.mxu0 0.0
  %1133 = vmatpush2.msra.mxu0 %v708
  %1134 = vmatprep.subr.mxu0 0.0
  %1135 = vmatpush2.msra.mxu0 %v707
  %1136 = vmatprep.subr.mxu0 0.0
  %1137 = vmatpush2.msra.mxu0 %v706
  %1138 = vmatprep.subr.mxu0 0.0
  %1139 = vmatpush2.msra.mxu0 %v705
  %1140 = vmatprep.mubr.f32.mxu0 %v1074
  %1141 = vmatmul.mubr.f32.gmra.mxu0 %v1065
  %v1142 = vpop.f32.mrf.mxu0
  %v1143 = vadd.f32 %v1040, %v1142
  %v1144 = vpop.f32.mrf.mxu0
  %1145 = vdwg.mxu0
  %s1146 = scalar_lea.vmem %s4, 288
  %v1147 = vld [vmem:[%s1146] sm:$0xff]
  %v1148 = vld [vmem:[%s1146 + $0x8] sm:$0xff]
  %v1149 = vld [vmem:[%s1146 + $0x10] sm:$0xff]
  %v1150 = vld [vmem:[%s1146 + $0x18] sm:$0xff]
  %v1151 = vld [vmem:[%s1146 + $0x20] sm:$0xff]
  %v1152 = vld [vmem:[%s1146 + $0x28] sm:$0xff]
  %v1153 = vld [vmem:[%s1146 + $0x30] sm:$0xff]
  %v1154 = vld [vmem:[%s1146 + $0x38] sm:$0xff]
  %v1155 = vld [vmem:[%s1146 + $0x40] sm:$0xff]
  %v1156 = vld [vmem:[%s1146 + $0x48] sm:$0xff]
  %v1157 = vld [vmem:[%s1146 + $0x50] sm:$0xff]
  %v1158 = vld [vmem:[%s1146 + $0x58] sm:$0xff]
  %v1159 = vld [vmem:[%s1146 + $0x60] sm:$0xff]
  %v1160 = vld [vmem:[%s1146 + $0x68] sm:$0xff]
  %v1161 = vld [vmem:[%s1146 + $0x70] sm:$0xff]
  %v1162 = vld [vmem:[%s1146 + $0x78] sm:$0xff]
  %v1163 = vld [vmem:[%s1146 + $0x80] sm:$0xff]
  %v1164 = vld [vmem:[%s1146 + $0x88] sm:$0xff]
  %1165 = vmatprep.subr.mxu0 0.0
  %1166 = vmatpush1.msra.mxu0 0.0
  %1167 = vmatprep.subr.mxu0 0.0
  %1168 = vmatpush1.msra.mxu0 0.0
  %1169 = vmatprep.subr.mxu0 0.0
  %1170 = vmatpush1.msra.mxu0 0.0
  %1171 = vmatprep.subr.mxu0 0.0
  %1172 = vmatpush1.msra.mxu0 0.0
  %1173 = vmatprep.subr.mxu0 0.0
  %1174 = vmatpush1.msra.mxu0 0.0
  %1175 = vmatprep.subr.mxu0 0.0
  %1176 = vmatpush1.msra.mxu0 0.0
  %1177 = vmatprep.subr.mxu0 0.0
  %1178 = vmatpush1.msra.mxu0 0.0
  %1179 = vmatprep.subr.mxu0 %v1164
  %1180 = vmatpush1.msra.mxu0 %v1163
  %1181 = vmatprep.subr.mxu0 %v1162
  %1182 = vmatpush1.msra.mxu0 %v1161
  %1183 = vmatprep.subr.mxu0 %v1160
  %1184 = vmatpush1.msra.mxu0 %v1159
  %1185 = vmatprep.subr.mxu0 %v1158
  %1186 = vmatpush1.msra.mxu0 %v1157
  %1187 = vmatprep.subr.mxu0 %v1156
  %1188 = vmatpush1.msra.mxu0 %v1155
  %1189 = vmatprep.subr.mxu0 %v1154
  %1190 = vmatpush1.msra.mxu0 %v1153
  %1191 = vmatprep.subr.mxu0 %v1152
  %1192 = vmatpush1.msra.mxu0 %v1151
  %1193 = vmatprep.subr.mxu0 %v1150
  %1194 = vmatpush1.msra.mxu0 %v1149
  %1195 = vmatprep.subr.mxu0 %v1148
  %1196 = vmatpush1.msra.mxu0 %v1147
  %1197 = vmatprep.subr.mxu0 0.0
  %1198 = vmatpush2.msra.mxu0 0.0
  %1199 = vmatprep.subr.mxu0 0.0
  %1200 = vmatpush2.msra.mxu0 0.0
  %1201 = vmatprep.subr.mxu0 0.0
  %1202 = vmatpush2.msra.mxu0 0.0
  %1203 = vmatprep.subr.mxu0 0.0
  %1204 = vmatpush2.msra.mxu0 0.0
  %1205 = vmatprep.subr.mxu0 0.0
  %1206 = vmatpush2.msra.mxu0 0.0
  %1207 = vmatprep.subr.mxu0 0.0
  %1208 = vmatpush2.msra.mxu0 0.0
  %1209 = vmatprep.subr.mxu0 0.0
  %1210 = vmatpush2.msra.mxu0 0.0
  %1211 = vmatprep.subr.mxu0 0.0
  %1212 = vmatpush2.msra.mxu0 0.0
  %1213 = vmatprep.subr.mxu0 0.0
  %1214 = vmatpush2.msra.mxu0 0.0
  %1215 = vmatprep.subr.mxu0 0.0
  %1216 = vmatpush2.msra.mxu0 0.0
  %1217 = vmatprep.subr.mxu0 0.0
  %1218 = vmatpush2.msra.mxu0 0.0
  %1219 = vmatprep.subr.mxu0 0.0
  %1220 = vmatpush2.msra.mxu0 0.0
  %1221 = vmatprep.subr.mxu0 0.0
  %1222 = vmatpush2.msra.mxu0 0.0
  %1223 = vmatprep.subr.mxu0 0.0
  %1224 = vmatpush2.msra.mxu0 0.0
  %1225 = vmatprep.subr.mxu0 0.0
  %1226 = vmatpush2.msra.mxu0 0.0
  %1227 = vmatprep.subr.mxu0 0.0
  %1228 = vmatpush2.msra.mxu0 0.0
  %1229 = vmatprep.mubr.f32.mxu0 0.0
  %1230 = vmatmul.mubr.f32.gmra.mxu0 %v496
  %v1231 = vpop.f32.mrf.mxu0
  %v1232 = vadd.f32 0.0, %v1231
  %v1233 = vpop.f32.mrf.mxu0
  %v1234 = vadd.f32 0.0, %v1233
  %1235 = vdwg.mxu0
  %v1236 = vmul.f32 %v32, %v1232
  %v1237 = vmul.f32 %v33, %v1234
  %v1238 = vmul.f32 %v34, %v1232
  %v1239 = vmul.f32 %v35, %v1234
  %v1240 = vmul.f32 %v36, %v1232
  %v1241 = vmul.f32 %v37, %v1234
  %v1242 = vmul.f32 %v38, %v1232
  %v1243 = vmul.f32 %v39, %v1234
  %v1244 = vmul.f32 %v40, %v1232
  %v1245 = vmul.f32 %v41, %v1234
  %v1246 = vmul.f32 %v42, %v1232
  %v1247 = vmul.f32 %v43, %v1234
  %v1248 = vmul.f32 %v44, %v1232
  %v1249 = vmul.f32 %v45, %v1234
  %v1250 = vmul.f32 %v46, %v1232
  %v1251 = vmul.f32 %v47, %v1234
  %v1252 = vrot.slane %v1236, 4
  %v1253 = vadd.f32 %v1236, %v1252
  %v1254 = vrot.slane %v1253, 2
  %v1255 = vadd.f32 %v1253, %v1254
  %v1256 = vrot.slane %v1255, 1
  %v1257 = vadd.f32 %v1255, %v1256
  %v1258 = vsel %vm234, %v1237, 0.0
  %v1259 = vrot.slane %v1258, 4
  %v1260 = vadd.f32 %v1258, %v1259
  %v1261 = vrot.slane %v1260, 2
  %v1262 = vadd.f32 %v1260, %v1261
  %v1263 = vrot.slane %v1262, 1
  %v1264 = vadd.f32 %v1262, %v1263
  %v1265 = vrot.slane %v1238, 4
  %v1266 = vadd.f32 %v1238, %v1265
  %v1267 = vrot.slane %v1266, 2
  %v1268 = vadd.f32 %v1266, %v1267
  %v1269 = vrot.slane %v1268, 1
  %v1270 = vadd.f32 %v1268, %v1269
  %v1271 = vsel %vm234, %v1239, 0.0
  %v1272 = vrot.slane %v1271, 4
  %v1273 = vadd.f32 %v1271, %v1272
  %v1274 = vrot.slane %v1273, 2
  %v1275 = vadd.f32 %v1273, %v1274
  %v1276 = vrot.slane %v1275, 1
  %v1277 = vadd.f32 %v1275, %v1276
  %v1278 = vrot.slane %v1240, 4
  %v1279 = vadd.f32 %v1240, %v1278
  %v1280 = vrot.slane %v1279, 2
  %v1281 = vadd.f32 %v1279, %v1280
  %v1282 = vrot.slane %v1281, 1
  %v1283 = vadd.f32 %v1281, %v1282
  %v1284 = vsel %vm234, %v1241, 0.0
  %v1285 = vrot.slane %v1284, 4
  %v1286 = vadd.f32 %v1284, %v1285
  %v1287 = vrot.slane %v1286, 2
  %v1288 = vadd.f32 %v1286, %v1287
  %v1289 = vrot.slane %v1288, 1
  %v1290 = vadd.f32 %v1288, %v1289
  %v1291 = vrot.slane %v1242, 4
  %v1292 = vadd.f32 %v1242, %v1291
  %v1293 = vrot.slane %v1292, 2
  %v1294 = vadd.f32 %v1292, %v1293
  %v1295 = vrot.slane %v1294, 1
  %v1296 = vadd.f32 %v1294, %v1295
  %v1297 = vsel %vm234, %v1243, 0.0
  %v1298 = vrot.slane %v1297, 4
  %v1299 = vadd.f32 %v1297, %v1298
  %v1300 = vrot.slane %v1299, 2
  %v1301 = vadd.f32 %v1299, %v1300
  %v1302 = vrot.slane %v1301, 1
  %v1303 = vadd.f32 %v1301, %v1302
  %v1304 = vrot.slane %v1244, 4
  %v1305 = vadd.f32 %v1244, %v1304
  %v1306 = vrot.slane %v1305, 2
  %v1307 = vadd.f32 %v1305, %v1306
  %v1308 = vrot.slane %v1307, 1
  %v1309 = vadd.f32 %v1307, %v1308
  %v1310 = vsel %vm234, %v1245, 0.0
  %v1311 = vrot.slane %v1310, 4
  %v1312 = vadd.f32 %v1310, %v1311
  %v1313 = vrot.slane %v1312, 2
  %v1314 = vadd.f32 %v1312, %v1313
  %v1315 = vrot.slane %v1314, 1
  %v1316 = vadd.f32 %v1314, %v1315
  %v1317 = vrot.slane %v1246, 4
  %v1318 = vadd.f32 %v1246, %v1317
  %v1319 = vrot.slane %v1318, 2
  %v1320 = vadd.f32 %v1318, %v1319
  %v1321 = vrot.slane %v1320, 1
  %v1322 = vadd.f32 %v1320, %v1321
  %v1323 = vsel %vm234, %v1247, 0.0
  %v1324 = vrot.slane %v1323, 4
  %v1325 = vadd.f32 %v1323, %v1324
  %v1326 = vrot.slane %v1325, 2
  %v1327 = vadd.f32 %v1325, %v1326
  %v1328 = vrot.slane %v1327, 1
  %v1329 = vadd.f32 %v1327, %v1328
  %v1330 = vrot.slane %v1248, 4
  %v1331 = vadd.f32 %v1248, %v1330
  %v1332 = vrot.slane %v1331, 2
  %v1333 = vadd.f32 %v1331, %v1332
  %v1334 = vrot.slane %v1333, 1
  %v1335 = vadd.f32 %v1333, %v1334
  %v1336 = vsel %vm234, %v1249, 0.0
  %v1337 = vrot.slane %v1336, 4
  %v1338 = vadd.f32 %v1336, %v1337
  %v1339 = vrot.slane %v1338, 2
  %v1340 = vadd.f32 %v1338, %v1339
  %v1341 = vrot.slane %v1340, 1
  %v1342 = vadd.f32 %v1340, %v1341
  %v1343 = vrot.slane %v1250, 4
  %v1344 = vadd.f32 %v1250, %v1343
  %v1345 = vrot.slane %v1344, 2
  %v1346 = vadd.f32 %v1344, %v1345
  %v1347 = vrot.slane %v1346, 1
  %v1348 = vadd.f32 %v1346, %v1347
  %v1349 = vsel %vm234, %v1251, 0.0
  %v1350 = vrot.slane %v1349, 4
  %v1351 = vadd.f32 %v1349, %v1350
  %v1352 = vrot.slane %v1351, 2
  %v1353 = vadd.f32 %v1351, %v1352
  %v1354 = vrot.slane %v1353, 1
  %v1355 = vadd.f32 %v1353, %v1354
  %s1356 = scalar_lea.vmem %s5, 320
  %v1357 = vld [vmem:[%s1356] sm:$0xff]
  %v1358 = vld [vmem:[%s1356 + $0x8] sm:$0xff]
  %v1359 = vld [vmem:[%s1356 + $0x10] sm:$0xff]
  %v1360 = vld [vmem:[%s1356 + $0x18] sm:$0xff]
  %v1361 = vld [vmem:[%s1356 + $0x20] sm:$0xff]
  %v1362 = vld [vmem:[%s1356 + $0x28] sm:$0xff]
  %v1363 = vld [vmem:[%s1356 + $0x30] sm:$0xff]
  %v1364 = vld [vmem:[%s1356 + $0x38] sm:$0xff]
  %v1365 = vld [vmem:[%s1356 + $0x40] sm:$0xff]
  %v1366 = vld [vmem:[%s1356 + $0x48] sm:$0xff]
  %v1367 = vld [vmem:[%s1356 + $0x50] sm:$0xff]
  %v1368 = vld [vmem:[%s1356 + $0x58] sm:$0xff]
  %v1369 = vld [vmem:[%s1356 + $0x60] sm:$0xff]
  %v1370 = vld [vmem:[%s1356 + $0x68] sm:$0xff]
  %v1371 = vld [vmem:[%s1356 + $0x70] sm:$0xff]
  %v1372 = vld [vmem:[%s1356 + $0x78] sm:$0xff]
  %v1373 = vld [vmem:[%s1356 + $0x80] sm:$0xff]
  %v1374 = vld [vmem:[%s1356 + $0x88] sm:$0xff]
  %v1375 = vld [vmem:[%s1356 + $0x90] sm:$0xff]
  %v1376 = vld [vmem:[%s1356 + $0x98] sm:$0xff]
  %v1393 = vsel %vm376, %v1270, %v1257
  %v1394 = vsel %vm378, %v1283, %v1393
  %v1395 = vsel %vm380, %v1296, %v1394
  %v1396 = vsel %vm382, %v1309, %v1395
  %v1397 = vsel %vm384, %v1322, %v1396
  %v1398 = vsel %vm386, %v1335, %v1397
  %v1399 = vsel %vm388, %v1348, %v1398
  %v1400 = vsel %vm376, %v1277, %v1264
  %v1401 = vsel %vm378, %v1290, %v1400
  %v1402 = vsel %vm380, %v1303, %v1401
  %v1403 = vsel %vm382, %v1316, %v1402
  %v1404 = vsel %vm384, %v1329, %v1403
  %v1405 = vsel %vm386, %v1342, %v1404
  %v1406 = vsel %vm388, %v1355, %v1405
  %v1408 = vsel %vm234, %v1406, 0
  %1410 = vmatprep.subr.mxu0 0.0
  %1411 = vmatpush1.msra.mxu0 %v1372
  %1412 = vmatprep.subr.mxu0 0.0
  %1413 = vmatpush1.msra.mxu0 %v1371
  %1414 = vmatprep.subr.mxu0 0.0
  %1415 = vmatpush1.msra.mxu0 %v1370
  %1416 = vmatprep.subr.mxu0 0.0
  %1417 = vmatpush1.msra.mxu0 %v1369
  %1418 = vmatprep.subr.mxu0 0.0
  %1419 = vmatpush1.msra.mxu0 %v1368
  %1420 = vmatprep.subr.mxu0 0.0
  %1421 = vmatpush1.msra.mxu0 %v1367
  %1422 = vmatprep.subr.mxu0 0.0
  %1423 = vmatpush1.msra.mxu0 %v1366
  %1424 = vmatprep.subr.mxu0 0.0
  %1425 = vmatpush1.msra.mxu0 %v1365
  %1426 = vmatprep.subr.mxu0 0.0
  %1427 = vmatpush1.msra.mxu0 %v1364
  %1428 = vmatprep.subr.mxu0 0.0
  %1429 = vmatpush1.msra.mxu0 %v1363
  %1430 = vmatprep.subr.mxu0 0.0
  %1431 = vmatpush1.msra.mxu0 %v1362
  %1432 = vmatprep.subr.mxu0 0.0
  %1433 = vmatpush1.msra.mxu0 %v1361
  %1434 = vmatprep.subr.mxu0 0.0
  %1435 = vmatpush1.msra.mxu0 %v1360
  %1436 = vmatprep.subr.mxu0 0.0
  %1437 = vmatpush1.msra.mxu0 %v1359
  %1438 = vmatprep.subr.mxu0 0.0
  %1439 = vmatpush1.msra.mxu0 %v1358
  %1440 = vmatprep.subr.mxu0 0.0
  %1441 = vmatpush1.msra.mxu0 %v1357
  %1442 = vmatprep.subr.mxu0 0.0
  %1443 = vmatpush2.msra.mxu0 0.0
  %1444 = vmatprep.subr.mxu0 0.0
  %1445 = vmatpush2.msra.mxu0 0.0
  %1446 = vmatprep.subr.mxu0 0.0
  %1447 = vmatpush2.msra.mxu0 0.0
  %1448 = vmatprep.subr.mxu0 0.0
  %1449 = vmatpush2.msra.mxu0 0.0
  %1450 = vmatprep.subr.mxu0 0.0
  %1451 = vmatpush2.msra.mxu0 0.0
  %1452 = vmatprep.subr.mxu0 0.0
  %1453 = vmatpush2.msra.mxu0 0.0
  %1454 = vmatprep.subr.mxu0 0.0
  %1455 = vmatpush2.msra.mxu0 0.0
  %1456 = vmatprep.subr.mxu0 0.0
  %1457 = vmatpush2.msra.mxu0 0.0
  %1458 = vmatprep.subr.mxu0 0.0
  %1459 = vmatpush2.msra.mxu0 0.0
  %1460 = vmatprep.subr.mxu0 0.0
  %1461 = vmatpush2.msra.mxu0 0.0
  %1462 = vmatprep.subr.mxu0 0.0
  %1463 = vmatpush2.msra.mxu0 0.0
  %1464 = vmatprep.subr.mxu0 0.0
  %1465 = vmatpush2.msra.mxu0 0.0
  %1466 = vmatprep.subr.mxu0 0.0
  %1467 = vmatpush2.msra.mxu0 %v1376
  %1468 = vmatprep.subr.mxu0 0.0
  %1469 = vmatpush2.msra.mxu0 %v1375
  %1470 = vmatprep.subr.mxu0 0.0
  %1471 = vmatpush2.msra.mxu0 %v1374
  %1472 = vmatprep.subr.mxu0 0.0
  %1473 = vmatpush2.msra.mxu0 %v1373
  %1474 = vmatprep.mubr.f32.mxu0 %v1408
  %1475 = vmatmul.mubr.f32.gmra.mxu0 %v1399
  %v1476 = vpop.f32.mrf.mxu0
  %v1477 = vadd.f32 0.0, %v1476
  %v1478 = vpop.f32.mrf.mxu0
  %1479 = vdwg.mxu0
  %v1480 = vadd.f32 %v1143, %v1477
  %s1481 = scalar_lea.vmem %s4, 432
  %v1482 = vld [vmem:[%s1481] sm:$0xff]
  %v1483 = vld [vmem:[%s1481 + $0x8] sm:$0xff]
  %v1484 = vld [vmem:[%s1481 + $0x10] sm:$0xff]
  %v1485 = vld [vmem:[%s1481 + $0x18] sm:$0xff]
  %v1486 = vld [vmem:[%s1481 + $0x20] sm:$0xff]
  %v1487 = vld [vmem:[%s1481 + $0x28] sm:$0xff]
  %v1488 = vld [vmem:[%s1481 + $0x30] sm:$0xff]
  %v1489 = vld [vmem:[%s1481 + $0x38] sm:$0xff]
  %v1490 = vld [vmem:[%s1481 + $0x40] sm:$0xff]
  %v1491 = vld [vmem:[%s1481 + $0x48] sm:$0xff]
  %v1492 = vld [vmem:[%s1481 + $0x50] sm:$0xff]
  %v1493 = vld [vmem:[%s1481 + $0x58] sm:$0xff]
  %v1494 = vld [vmem:[%s1481 + $0x60] sm:$0xff]
  %v1495 = vld [vmem:[%s1481 + $0x68] sm:$0xff]
  %v1496 = vld [vmem:[%s1481 + $0x70] sm:$0xff]
  %v1497 = vld [vmem:[%s1481 + $0x78] sm:$0xff]
  %v1498 = vld [vmem:[%s1481 + $0x80] sm:$0xff]
  %v1499 = vld [vmem:[%s1481 + $0x88] sm:$0xff]
  %1500 = vmatprep.subr.mxu0 0.0
  %1501 = vmatpush1.msra.mxu0 0.0
  %1502 = vmatprep.subr.mxu0 0.0
  %1503 = vmatpush1.msra.mxu0 0.0
  %1504 = vmatprep.subr.mxu0 0.0
  %1505 = vmatpush1.msra.mxu0 0.0
  %1506 = vmatprep.subr.mxu0 0.0
  %1507 = vmatpush1.msra.mxu0 0.0
  %1508 = vmatprep.subr.mxu0 0.0
  %1509 = vmatpush1.msra.mxu0 0.0
  %1510 = vmatprep.subr.mxu0 0.0
  %1511 = vmatpush1.msra.mxu0 0.0
  %1512 = vmatprep.subr.mxu0 0.0
  %1513 = vmatpush1.msra.mxu0 0.0
  %1514 = vmatprep.subr.mxu0 %v1499
  %1515 = vmatpush1.msra.mxu0 %v1498
  %1516 = vmatprep.subr.mxu0 %v1497
  %1517 = vmatpush1.msra.mxu0 %v1496
  %1518 = vmatprep.subr.mxu0 %v1495
  %1519 = vmatpush1.msra.mxu0 %v1494
  %1520 = vmatprep.subr.mxu0 %v1493
  %1521 = vmatpush1.msra.mxu0 %v1492
  %1522 = vmatprep.subr.mxu0 %v1491
  %1523 = vmatpush1.msra.mxu0 %v1490
  %1524 = vmatprep.subr.mxu0 %v1489
  %1525 = vmatpush1.msra.mxu0 %v1488
  %1526 = vmatprep.subr.mxu0 %v1487
  %1527 = vmatpush1.msra.mxu0 %v1486
  %1528 = vmatprep.subr.mxu0 %v1485
  %1529 = vmatpush1.msra.mxu0 %v1484
  %1530 = vmatprep.subr.mxu0 %v1483
  %1531 = vmatpush1.msra.mxu0 %v1482
  %1532 = vmatprep.subr.mxu0 0.0
  %1533 = vmatpush2.msra.mxu0 0.0
  %1534 = vmatprep.subr.mxu0 0.0
  %1535 = vmatpush2.msra.mxu0 0.0
  %1536 = vmatprep.subr.mxu0 0.0
  %1537 = vmatpush2.msra.mxu0 0.0
  %1538 = vmatprep.subr.mxu0 0.0
  %1539 = vmatpush2.msra.mxu0 0.0
  %1540 = vmatprep.subr.mxu0 0.0
  %1541 = vmatpush2.msra.mxu0 0.0
  %1542 = vmatprep.subr.mxu0 0.0
  %1543 = vmatpush2.msra.mxu0 0.0
  %1544 = vmatprep.subr.mxu0 0.0
  %1545 = vmatpush2.msra.mxu0 0.0
  %1546 = vmatprep.subr.mxu0 0.0
  %1547 = vmatpush2.msra.mxu0 0.0
  %1548 = vmatprep.subr.mxu0 0.0
  %1549 = vmatpush2.msra.mxu0 0.0
  %1550 = vmatprep.subr.mxu0 0.0
  %1551 = vmatpush2.msra.mxu0 0.0
  %1552 = vmatprep.subr.mxu0 0.0
  %1553 = vmatpush2.msra.mxu0 0.0
  %1554 = vmatprep.subr.mxu0 0.0
  %1555 = vmatpush2.msra.mxu0 0.0
  %1556 = vmatprep.subr.mxu0 0.0
  %1557 = vmatpush2.msra.mxu0 0.0
  %1558 = vmatprep.subr.mxu0 0.0
  %1559 = vmatpush2.msra.mxu0 0.0
  %1560 = vmatprep.subr.mxu0 0.0
  %1561 = vmatpush2.msra.mxu0 0.0
  %1562 = vmatprep.subr.mxu0 0.0
  %1563 = vmatpush2.msra.mxu0 0.0
  %1564 = vmatprep.mubr.f32.mxu0 0.0
  %1565 = vmatmul.mubr.f32.gmra.mxu0 %v496
  %v1566 = vpop.f32.mrf.mxu0
  %v1567 = vadd.f32 0.0, %v1566
  %v1568 = vpop.f32.mrf.mxu0
  %v1569 = vadd.f32 0.0, %v1568
  %1570 = vdwg.mxu0
  %v1571 = vmul.f32 %v32, %v1567
  %v1572 = vmul.f32 %v33, %v1569
  %v1573 = vmul.f32 %v34, %v1567
  %v1574 = vmul.f32 %v35, %v1569
  %v1575 = vmul.f32 %v36, %v1567
  %v1576 = vmul.f32 %v37, %v1569
  %v1577 = vmul.f32 %v38, %v1567
  %v1578 = vmul.f32 %v39, %v1569
  %v1579 = vmul.f32 %v40, %v1567
  %v1580 = vmul.f32 %v41, %v1569
  %v1581 = vmul.f32 %v42, %v1567
  %v1582 = vmul.f32 %v43, %v1569
  %v1583 = vmul.f32 %v44, %v1567
  %v1584 = vmul.f32 %v45, %v1569
  %v1585 = vmul.f32 %v46, %v1567
  %v1586 = vmul.f32 %v47, %v1569
  %v1587 = vrot.slane %v1571, 4
  %v1588 = vadd.f32 %v1571, %v1587
  %v1589 = vrot.slane %v1588, 2
  %v1590 = vadd.f32 %v1588, %v1589
  %v1591 = vrot.slane %v1590, 1
  %v1592 = vadd.f32 %v1590, %v1591
  %v1593 = vsel %vm234, %v1572, 0.0
  %v1594 = vrot.slane %v1593, 4
  %v1595 = vadd.f32 %v1593, %v1594
  %v1596 = vrot.slane %v1595, 2
  %v1597 = vadd.f32 %v1595, %v1596
  %v1598 = vrot.slane %v1597, 1
  %v1599 = vadd.f32 %v1597, %v1598
  %v1600 = vrot.slane %v1573, 4
  %v1601 = vadd.f32 %v1573, %v1600
  %v1602 = vrot.slane %v1601, 2
  %v1603 = vadd.f32 %v1601, %v1602
  %v1604 = vrot.slane %v1603, 1
  %v1605 = vadd.f32 %v1603, %v1604
  %v1606 = vsel %vm234, %v1574, 0.0
  %v1607 = vrot.slane %v1606, 4
  %v1608 = vadd.f32 %v1606, %v1607
  %v1609 = vrot.slane %v1608, 2
  %v1610 = vadd.f32 %v1608, %v1609
  %v1611 = vrot.slane %v1610, 1
  %v1612 = vadd.f32 %v1610, %v1611
  %v1613 = vrot.slane %v1575, 4
  %v1614 = vadd.f32 %v1575, %v1613
  %v1615 = vrot.slane %v1614, 2
  %v1616 = vadd.f32 %v1614, %v1615
  %v1617 = vrot.slane %v1616, 1
  %v1618 = vadd.f32 %v1616, %v1617
  %v1619 = vsel %vm234, %v1576, 0.0
  %v1620 = vrot.slane %v1619, 4
  %v1621 = vadd.f32 %v1619, %v1620
  %v1622 = vrot.slane %v1621, 2
  %v1623 = vadd.f32 %v1621, %v1622
  %v1624 = vrot.slane %v1623, 1
  %v1625 = vadd.f32 %v1623, %v1624
  %v1626 = vrot.slane %v1577, 4
  %v1627 = vadd.f32 %v1577, %v1626
  %v1628 = vrot.slane %v1627, 2
  %v1629 = vadd.f32 %v1627, %v1628
  %v1630 = vrot.slane %v1629, 1
  %v1631 = vadd.f32 %v1629, %v1630
  %v1632 = vsel %vm234, %v1578, 0.0
  %v1633 = vrot.slane %v1632, 4
  %v1634 = vadd.f32 %v1632, %v1633
  %v1635 = vrot.slane %v1634, 2
  %v1636 = vadd.f32 %v1634, %v1635
  %v1637 = vrot.slane %v1636, 1
  %v1638 = vadd.f32 %v1636, %v1637
  %v1639 = vrot.slane %v1579, 4
  %v1640 = vadd.f32 %v1579, %v1639
  %v1641 = vrot.slane %v1640, 2
  %v1642 = vadd.f32 %v1640, %v1641
  %v1643 = vrot.slane %v1642, 1
  %v1644 = vadd.f32 %v1642, %v1643
  %v1645 = vsel %vm234, %v1580, 0.0
  %v1646 = vrot.slane %v1645, 4
  %v1647 = vadd.f32 %v1645, %v1646
  %v1648 = vrot.slane %v1647, 2
  %v1649 = vadd.f32 %v1647, %v1648
  %v1650 = vrot.slane %v1649, 1
  %v1651 = vadd.f32 %v1649, %v1650
  %v1652 = vrot.slane %v1581, 4
  %v1653 = vadd.f32 %v1581, %v1652
  %v1654 = vrot.slane %v1653, 2
  %v1655 = vadd.f32 %v1653, %v1654
  %v1656 = vrot.slane %v1655, 1
  %v1657 = vadd.f32 %v1655, %v1656
  %v1658 = vsel %vm234, %v1582, 0.0
  %v1659 = vrot.slane %v1658, 4
  %v1660 = vadd.f32 %v1658, %v1659
  %v1661 = vrot.slane %v1660, 2
  %v1662 = vadd.f32 %v1660, %v1661
  %v1663 = vrot.slane %v1662, 1
  %v1664 = vadd.f32 %v1662, %v1663
  %v1665 = vrot.slane %v1583, 4
  %v1666 = vadd.f32 %v1583, %v1665
  %v1667 = vrot.slane %v1666, 2
  %v1668 = vadd.f32 %v1666, %v1667
  %v1669 = vrot.slane %v1668, 1
  %v1670 = vadd.f32 %v1668, %v1669
  %v1671 = vsel %vm234, %v1584, 0.0
  %v1672 = vrot.slane %v1671, 4
  %v1673 = vadd.f32 %v1671, %v1672
  %v1674 = vrot.slane %v1673, 2
  %v1675 = vadd.f32 %v1673, %v1674
  %v1676 = vrot.slane %v1675, 1
  %v1677 = vadd.f32 %v1675, %v1676
  %v1678 = vrot.slane %v1585, 4
  %v1679 = vadd.f32 %v1585, %v1678
  %v1680 = vrot.slane %v1679, 2
  %v1681 = vadd.f32 %v1679, %v1680
  %v1682 = vrot.slane %v1681, 1
  %v1683 = vadd.f32 %v1681, %v1682
  %v1684 = vsel %vm234, %v1586, 0.0
  %v1685 = vrot.slane %v1684, 4
  %v1686 = vadd.f32 %v1684, %v1685
  %v1687 = vrot.slane %v1686, 2
  %v1688 = vadd.f32 %v1686, %v1687
  %v1689 = vrot.slane %v1688, 1
  %v1690 = vadd.f32 %v1688, %v1689
  %s1691 = scalar_lea.vmem %s5, 480
  %v1692 = vld [vmem:[%s1691] sm:$0xff]
  %v1693 = vld [vmem:[%s1691 + $0x8] sm:$0xff]
  %v1694 = vld [vmem:[%s1691 + $0x10] sm:$0xff]
  %v1695 = vld [vmem:[%s1691 + $0x18] sm:$0xff]
  %v1696 = vld [vmem:[%s1691 + $0x20] sm:$0xff]
  %v1697 = vld [vmem:[%s1691 + $0x28] sm:$0xff]
  %v1698 = vld [vmem:[%s1691 + $0x30] sm:$0xff]
  %v1699 = vld [vmem:[%s1691 + $0x38] sm:$0xff]
  %v1700 = vld [vmem:[%s1691 + $0x40] sm:$0xff]
  %v1701 = vld [vmem:[%s1691 + $0x48] sm:$0xff]
  %v1702 = vld [vmem:[%s1691 + $0x50] sm:$0xff]
  %v1703 = vld [vmem:[%s1691 + $0x58] sm:$0xff]
  %v1704 = vld [vmem:[%s1691 + $0x60] sm:$0xff]
  %v1705 = vld [vmem:[%s1691 + $0x68] sm:$0xff]
  %v1706 = vld [vmem:[%s1691 + $0x70] sm:$0xff]
  %v1707 = vld [vmem:[%s1691 + $0x78] sm:$0xff]
  %v1708 = vld [vmem:[%s1691 + $0x80] sm:$0xff]
  %v1709 = vld [vmem:[%s1691 + $0x88] sm:$0xff]
  %v1710 = vld [vmem:[%s1691 + $0x90] sm:$0xff]
  %v1711 = vld [vmem:[%s1691 + $0x98] sm:$0xff]
  %v1728 = vsel %vm376, %v1605, %v1592
  %v1729 = vsel %vm378, %v1618, %v1728
  %v1730 = vsel %vm380, %v1631, %v1729
  %v1731 = vsel %vm382, %v1644, %v1730
  %v1732 = vsel %vm384, %v1657, %v1731
  %v1733 = vsel %vm386, %v1670, %v1732
  %v1734 = vsel %vm388, %v1683, %v1733
  %v1735 = vsel %vm376, %v1612, %v1599
  %v1736 = vsel %vm378, %v1625, %v1735
  %v1737 = vsel %vm380, %v1638, %v1736
  %v1738 = vsel %vm382, %v1651, %v1737
  %v1739 = vsel %vm384, %v1664, %v1738
  %v1740 = vsel %vm386, %v1677, %v1739
  %v1741 = vsel %vm388, %v1690, %v1740
  %v1743 = vsel %vm234, %v1741, 0
  %1745 = vmatprep.subr.mxu0 0.0
  %1746 = vmatpush1.msra.mxu0 %v1707
  %1747 = vmatprep.subr.mxu0 0.0
  %1748 = vmatpush1.msra.mxu0 %v1706
  %1749 = vmatprep.subr.mxu0 0.0
  %1750 = vmatpush1.msra.mxu0 %v1705
  %1751 = vmatprep.subr.mxu0 0.0
  %1752 = vmatpush1.msra.mxu0 %v1704
  %1753 = vmatprep.subr.mxu0 0.0
  %1754 = vmatpush1.msra.mxu0 %v1703
  %1755 = vmatprep.subr.mxu0 0.0
  %1756 = vmatpush1.msra.mxu0 %v1702
  %1757 = vmatprep.subr.mxu0 0.0
  %1758 = vmatpush1.msra.mxu0 %v1701
  %1759 = vmatprep.subr.mxu0 0.0
  %1760 = vmatpush1.msra.mxu0 %v1700
  %1761 = vmatprep.subr.mxu0 0.0
  %1762 = vmatpush1.msra.mxu0 %v1699
  %1763 = vmatprep.subr.mxu0 0.0
  %1764 = vmatpush1.msra.mxu0 %v1698
  %1765 = vmatprep.subr.mxu0 0.0
  %1766 = vmatpush1.msra.mxu0 %v1697
  %1767 = vmatprep.subr.mxu0 0.0
  %1768 = vmatpush1.msra.mxu0 %v1696
  %1769 = vmatprep.subr.mxu0 0.0
  %1770 = vmatpush1.msra.mxu0 %v1695
  %1771 = vmatprep.subr.mxu0 0.0
  %1772 = vmatpush1.msra.mxu0 %v1694
  %1773 = vmatprep.subr.mxu0 0.0
  %1774 = vmatpush1.msra.mxu0 %v1693
  %1775 = vmatprep.subr.mxu0 0.0
  %1776 = vmatpush1.msra.mxu0 %v1692
  %1777 = vmatprep.subr.mxu0 0.0
  %1778 = vmatpush2.msra.mxu0 0.0
  %1779 = vmatprep.subr.mxu0 0.0
  %1780 = vmatpush2.msra.mxu0 0.0
  %1781 = vmatprep.subr.mxu0 0.0
  %1782 = vmatpush2.msra.mxu0 0.0
  %1783 = vmatprep.subr.mxu0 0.0
  %1784 = vmatpush2.msra.mxu0 0.0
  %1785 = vmatprep.subr.mxu0 0.0
  %1786 = vmatpush2.msra.mxu0 0.0
  %1787 = vmatprep.subr.mxu0 0.0
  %1788 = vmatpush2.msra.mxu0 0.0
  %1789 = vmatprep.subr.mxu0 0.0
  %1790 = vmatpush2.msra.mxu0 0.0
  %1791 = vmatprep.subr.mxu0 0.0
  %1792 = vmatpush2.msra.mxu0 0.0
  %1793 = vmatprep.subr.mxu0 0.0
  %1794 = vmatpush2.msra.mxu0 0.0
  %1795 = vmatprep.subr.mxu0 0.0
  %1796 = vmatpush2.msra.mxu0 0.0
  %1797 = vmatprep.subr.mxu0 0.0
  %1798 = vmatpush2.msra.mxu0 0.0
  %1799 = vmatprep.subr.mxu0 0.0
  %1800 = vmatpush2.msra.mxu0 0.0
  %1801 = vmatprep.subr.mxu0 0.0
  %1802 = vmatpush2.msra.mxu0 %v1711
  %1803 = vmatprep.subr.mxu0 0.0
  %1804 = vmatpush2.msra.mxu0 %v1710
  %1805 = vmatprep.subr.mxu0 0.0
  %1806 = vmatpush2.msra.mxu0 %v1709
  %1807 = vmatprep.subr.mxu0 0.0
  %1808 = vmatpush2.msra.mxu0 %v1708
  %1809 = vmatprep.mubr.f32.mxu0 %v1743
  %1810 = vmatmul.mubr.f32.gmra.mxu0 %v1734
  %v1811 = vpop.f32.mrf.mxu0
  %v1812 = vadd.f32 0.0, %v1811
  %v1813 = vpop.f32.mrf.mxu0
  %1814 = vdwg.mxu0
  %v1815 = vadd.f32 %v1480, %v1812
  %vm1816 = vcmask 195584
  %1817 = vst.msk [vmem:[%s9] sm:$0xff] %vm1816, %v1815
  // Predicated region
  $region38: #{tfn_forward.3} parent=0 // pred_check
    _
  $region39: #{tfn_forward.3} parent=0 // pred_check_branch
    %1819 = sbr.rel (0) target = $region41
  $region40: #{tfn_forward.3} parent=0 // pred_region
    _
  $region41: #{tfn_forward.3} parent=0 // pred_fallthru
    _
  // Predicated region
  $region42: #{tfn_forward.3} parent=0 // pred_check
    _
  $region43: #{tfn_forward.3} parent=0 // pred_check_branch
    %1821 = sbr.rel (0) target = $region45
  $region44: #{tfn_forward.3} parent=0 // pred_region
    _
  $region45: #{tfn_forward.3} parent=0 // pred_fallthru
    _

</llo_original>
